<compile_context>
chip_gen: v5e
topology: v5e:2x2
jax: 0.10.0
libtpu: 0.0.40
codegen_flags: <defaults>
</compile_context>

<pallas_src>
import numpy as np
import jax
import jax.numpy as jnp
from jax.experimental import pallas as pl
from jax.experimental.pallas import tpu as pltpu


# --------------------------------------------------------------------------------------
# Fused forward kernel
# --------------------------------------------------------------------------------------
# Activation layouts (values / scratch, lane index shown in brackets):
#   conv1 out z1 : (2*B*7, 224)  row = parity*B*7 + b*7 + m, lane = ow*16 + cout
#   pool1 (W)    : (2*B*7, 208)  lane = w*16 + cin
#   conv2 LHS    : (B*5, 832)    row = b*5 + oh, lane = tap*208 + w*16 + cin
#   conv2 out z2 : (B*5, 160)    lane = ow*32 + cout
#   fc1 LHS      : (B, 512)      lane = h*128 + w*32 + cout   (matches torch .view(-1,512))
#   fc2 out      : (B, 128)      lanes 0..9 valid, rest zero-padded

def _fused_forward_kernel(x_ref, w1_ref, b1_ref, w2_ref, b2_ref,
                          wf1_ref, bf1_ref, wf2_ref, bf2_ref, o_ref,
                          lhs2_buf, lhs3_buf):
    f32, bf16 = jnp.float32, jnp.bfloat16
    B = o_ref.shape[0]
    R = 7 * B                                    # conv1 output rows per parity, all batches

    # ---- conv1: Conv2d(1, 16, 8, stride=2, padding=3) + ReLU — one matmul --------------
    z1 = jnp.dot(x_ref[...], w1_ref[...], preferred_element_type=f32)    # (2*B*7, 224)
    z1 = jnp.maximum(z1 + b1_ref[...], 0.0)

    # ---- max_pool2d(2, stride=1), W direction: 14 -> 13 columns ------------------------
    z1w = jnp.maximum(z1[:, 0:208], z1[:, 16:224])                       # (2*B*7, 208)
    e_w = z1w[0:R]                               # W-pooled conv1 rows 2m   (m = 0..6)
    o_w = z1w[R:2 * R]                           # W-pooled conv1 rows 2m+1 (m = 0..6)
    p1e = jnp.maximum(e_w, o_w)                  # pool1 rows 2m, m = 0..6

    # ---- conv2 LHS assembly: fold the 4 kernel-row taps into K, batch into M -----------
    for b in range(B):
        p1o = jnp.maximum(o_w[b*7:b*7+6], e_w[b*7+1:b*7+7])   # pool1 rows 2m+1, m = 0..5
        r = b * 5
        lhs2_buf[r:r+5,   0:208] = p1e[b*7:b*7+5]      # tap i=0: pool1 row 2*oh
        lhs2_buf[r:r+5, 208:416] = p1o[0:5]            # tap i=1: pool1 row 2*oh+1
        lhs2_buf[r:r+5, 416:624] = p1e[b*7+1:b*7+6]    # tap i=2: pool1 row 2*oh+2
        lhs2_buf[r:r+5, 624:832] = p1o[1:6]            # tap i=3: pool1 row 2*oh+3

    # ---- conv2: Conv2d(16, 32, 4, stride=2) + ReLU — one matmul ------------------------
    z2 = jnp.dot(lhs2_buf[...].astype(bf16), w2_ref[...],
                 preferred_element_type=f32)                             # (B*5, 160)
    z2 = jnp.maximum(z2 + b2_ref[...], 0.0)

    # ---- max_pool2d(2, stride=1): 5x5 -> 4x4 -------------------------------------------
    z2w = jnp.maximum(z2[:, 0:128], z2[:, 32:160])                       # (B*5, 128)
    for b in range(B):
        zb = z2w[b*5:b*5+5]
        p2 = jnp.maximum(zb[0:4], zb[1:5])       # (4, 128), lane = w*32 + cout
        for h in range(4):                       # flatten into 512 lanes (torch NCHW order
            lhs3_buf[b:b+1, h*128:(h+1)*128] = p2[h:h+1, :]   # handled by wf1 layout)

    # ---- fc1 (+ReLU) and fc2 — one matmul each, batch in M -----------------------------
    h1 = jnp.dot(lhs3_buf[...].astype(bf16), wf1_ref[...],
                 preferred_element_type=f32)                             # (B, 32)
    h1 = jnp.maximum(h1 + bf1_ref[...], 0.0)
    logits = jnp.dot(h1.astype(bf16), wf2_ref[...],
                     preferred_element_type=f32) + bf2_ref[...]          # (B, 128)
    o_ref[...] = logits.astype(o_ref.dtype)      # single lane-dense store


# --------------------------------------------------------------------------------------
# One-time (outside jit) weight re-layout into GEMM-ready, lane-dense matrices
# --------------------------------------------------------------------------------------

def prepare_kernel_params(params):
    c1w = np.asarray(params["conv1_w"], np.float32)   # (16, 1, 8, 8)
    c1b = np.asarray(params["conv1_b"], np.float32)
    c2w = np.asarray(params["conv2_w"], np.float32)   # (32, 16, 4, 4)
    c2b = np.asarray(params["conv2_b"], np.float32)
    f1w = np.asarray(params["fc1_w"], np.float32)     # (32, 512)
    f1b = np.asarray(params["fc1_b"], np.float32)
    f2w = np.asarray(params["fc2_w"], np.float32)     # (10, 32)
    f2b = np.asarray(params["fc2_b"], np.float32)

    # conv1 lowered weights, taps folded into K: W1[i*34 + w, ow*16 + co] = c1w[co,0,i,w-2*ow]
    w1 = np.zeros((8, 34, 14 * 16), np.float32)
    for i in range(8):
        for ow in range(14):
            for j in range(8):
                w1[i, 2 * ow + j, ow * 16:(ow + 1) * 16] = c1w[:, 0, i, j]
    w1 = w1.reshape(8 * 34, 14 * 16)                                   # (272, 224)

    # conv2 lowered weights: W2[i*208 + w*16 + ci, ow*32 + co] = c2w[co,ci,i,w-2*ow]
    w2 = np.zeros((4, 13 * 16, 5 * 32), np.float32)
    for i in range(4):
        for ow in range(5):
            for j in range(4):
                w = 2 * ow + j
                w2[i, w * 16:(w + 1) * 16, ow * 32:(ow + 1) * 32] = c2w[:, :, i, j].T
    w2 = w2.reshape(4 * 13 * 16, 5 * 32)                               # (832, 160)

    # fc1 regrouped to the kernel's flatten order [h*128 + w*32 + co] (matches torch view):
    wf1 = np.zeros((4, 4 * 32, 32), np.float32)
    for h in range(4):
        for w in range(4):
            for co in range(32):
                wf1[h, w * 32 + co, :] = f1w[:, co * 16 + h * 4 + w]
    wf1 = wf1.reshape(512, 32)

    # fc2 padded to 128 output lanes (wrapper slices [:, :10])
    wf2 = np.zeros((32, 128), np.float32)
    wf2[:, :10] = f2w.T
    bf2 = np.zeros((1, 128), np.float32)
    bf2[0, :10] = f2b

    bf16 = jnp.bfloat16
    return {
        "w1": jnp.asarray(w1, bf16),
        "b1": jnp.asarray(np.tile(c1b, 14)[None, :], jnp.float32),    # (1, 224)
        "w2": jnp.asarray(w2, bf16),
        "b2": jnp.asarray(np.tile(c2b, 5)[None, :], jnp.float32),     # (1, 160)
        "wf1": jnp.asarray(wf1, bf16),
        "bf1": jnp.asarray(f1b[None, :], jnp.float32),                # (1, 32)
        "wf2": jnp.asarray(wf2, bf16),                                # (32, 128)
        "bf2": jnp.asarray(bf2, jnp.float32),                         # (1, 128)
    }


def init_params(key):
    """PyTorch-layout parameters with torch-default-style uniform init."""
    def uniform(k, shape, fan_in):
        bound = 1.0 / np.sqrt(fan_in)
        return jax.random.uniform(k, shape, jnp.float32, -bound, bound)
    ks = jax.random.split(key, 8)
    return {
        "conv1_w": uniform(ks[0], (16, 1, 8, 8), 1 * 8 * 8),
        "conv1_b": uniform(ks[1], (16,), 1 * 8 * 8),
        "conv2_w": uniform(ks[2], (32, 16, 4, 4), 16 * 4 * 4),
        "conv2_b": uniform(ks[3], (32,), 16 * 4 * 4),
        "fc1_w":   uniform(ks[4], (32, 32 * 4 * 4), 32 * 4 * 4),
        "fc1_b":   uniform(ks[5], (32,), 32 * 4 * 4),
        "fc2_w":   uniform(ks[6], (10, 32), 32),
        "fc2_b":   uniform(ks[7], (10,), 32),
    }


# --------------------------------------------------------------------------------------
# Forward wrapper: tiny pad + tap-gather of the input (XLA), then one grid-less kernel
# --------------------------------------------------------------------------------------

def sample_convnet_forward(kparams, x_nchw):
    """x_nchw: (B, 1, 28, 28) float32 -> logits (B, 10)."""
    B = x_nchw.shape[0]
    xpad = jnp.pad(x_nchw.reshape(B, 28, 28), ((0, 0), (3, 3), (3, 3)))   # (B, 34, 34)
    # Gather the 8 conv1 kernel-row taps per output row (split by output-row parity) so the
    # kernel's conv1 LHS is one contiguous (2*B*7, 8*34) bf16 slab (taps folded into K).
    m = np.arange(7)[:, None] * 4 + np.arange(8)[None, :]   # even rows: padded row 4m + i
    rows = np.stack([m, m + 2], axis=0)                     # (parity, m, tap); odd: 4m+2+i
    lhs1 = xpad[:, rows, :]                                  # (B, 2, 7, 8, 34)
    lhs1 = (lhs1.transpose(1, 0, 2, 3, 4)
                .reshape(2 * B * 7, 8 * 34)
                .astype(jnp.bfloat16))                       # (2*B*7, 272)

    vmem = pl.BlockSpec(memory_space=pltpu.MemorySpace.VMEM)
    out = pl.pallas_call(
        _fused_forward_kernel,
        out_shape=jax.ShapeDtypeStruct((B, 128), jnp.float32),   # lane-dense, padded logits
        in_specs=[vmem] * 9,
        out_specs=vmem,
        scratch_shapes=[pltpu.VMEM((B * 5, 4 * 208), jnp.float32),   # conv2 LHS
                        pltpu.VMEM((B, 512), jnp.float32)],          # fc1 LHS
    )(lhs1, kparams["w1"], kparams["b1"], kparams["w2"], kparams["b2"],
      kparams["wf1"], kparams["bf1"], kparams["wf2"], kparams["bf2"])
    return out[:, :10]


# --------------------------------------------------------------------------------------
# Plain-JAX reference (exact PyTorch semantics) for numerical validation
# --------------------------------------------------------------------------------------

def reference_forward(params, x):
    dn = ("NCHW", "OIHW", "NCHW")
    hi = jax.lax.Precision.HIGHEST
    y = jax.lax.conv_general_dilated(x, params["conv1_w"], (2, 2), ((3, 3), (3, 3)),
                                     dimension_numbers=dn, precision=hi)
    y = jax.nn.relu(y + params["conv1_b"][None, :, None, None])
    y = jax.lax.reduce_window(y, -jnp.inf, jax.lax.max, (1, 1, 2, 2), (1, 1, 1, 1), "VALID")
    y = jax.lax.conv_general_dilated(y, params["conv2_w"], (2, 2), "VALID",
                                     dimension_numbers=dn, precision=hi)
    y = jax.nn.relu(y + params["conv2_b"][None, :, None, None])
    y = jax.lax.reduce_window(y, -jnp.inf, jax.lax.max, (1, 1, 2, 2), (1, 1, 1, 1), "VALID")
    y = y.reshape(y.shape[0], -1)
    y = jax.nn.relu(y @ params["fc1_w"].T + params["fc1_b"])
    return y @ params["fc2_w"].T + params["fc2_b"]


if __name__ == "__main__":
    key = jax.random.PRNGKey(0)
    k_x, k_p = jax.random.split(key)
    x = jax.random.normal(k_x, (2, 1, 28, 28), dtype=jnp.float32)   # NCHW, like PyTorch
    params = init_params(k_p)
    kparams = prepare_kernel_params(params)      # one-time weight re-layout, outside jit

    fwd = jax.jit(sample_convnet_forward)
    logits = fwd(kparams, x)
    jax.block_until_ready(logits)
    assert logits.shape == (2, 10), logits.shape

    # Validate against the plain-JAX reference of the PyTorch module (tolerance covers the
    # bf16 MXU inputs used inside the kernel; pooled activations stay f32 in the kernel).
    ref = jax.jit(reference_forward)(params, x)
    np.testing.assert_allclose(np.asarray(logits), np.asarray(ref), rtol=3e-2, atol=3e-2)

    print("KERNEL_OK")
</pallas_src>

<mosaic_0001>
module attributes {stable_mosaic.version = 11 : i64} {
  func.func @_fused_forward_kernel(%arg0: memref<28x272xbf16, #tpu.memory_space<vmem>>, %arg1: memref<272x224xbf16, #tpu.memory_space<vmem>>, %arg2: memref<1x224xf32, #tpu.memory_space<vmem>>, %arg3: memref<832x160xbf16, #tpu.memory_space<vmem>>, %arg4: memref<1x160xf32, #tpu.memory_space<vmem>>, %arg5: memref<512x32xbf16, #tpu.memory_space<vmem>>, %arg6: memref<1x32xf32, #tpu.memory_space<vmem>>, %arg7: memref<32x128xbf16, #tpu.memory_space<vmem>>, %arg8: memref<1x128xf32, #tpu.memory_space<vmem>>, %arg9: memref<2x128xf32, #tpu.memory_space<vmem>>, %arg10: memref<10x832xf32, #tpu.memory_space<vmem>>, %arg11: memref<2x512xf32, #tpu.memory_space<vmem>>) attributes {dimension_semantics = [], scalar_prefetch = 0 : i64, scratch_operands = 2 : i64, tpu.core_type = #tpu.core_type<tc>} {
    %c0 = arith.constant 0 : index
    %c0_0 = arith.constant 0 : index
    %0 = vector.load %arg0[%c0, %c0_0] : memref<28x272xbf16, #tpu.memory_space<vmem>>, vector<28x272xbf16>
    %c0_1 = arith.constant 0 : index
    %c0_2 = arith.constant 0 : index
    %1 = vector.load %arg1[%c0_1, %c0_2] : memref<272x224xbf16, #tpu.memory_space<vmem>>, vector<272x224xbf16>
    %cst = arith.constant dense<0.000000e+00> : vector<28x224xf32>
    %2 = tpu.matmul %0, %1, %cst {dimension_numbers = #tpu.dot_dimension_numbers<[1], [0], [0], [1], [0, 0, 1, 1], [], []>} : vector<28x272xbf16>, vector<272x224xbf16>, vector<28x224xf32> -> vector<28x224xf32>
    %c0_3 = arith.constant 0 : index
    %c0_4 = arith.constant 0 : index
    %3 = vector.load %arg2[%c0_3, %c0_4] : memref<1x224xf32, #tpu.memory_space<vmem>>, vector<1x224xf32>
    %4 = vector.broadcast %3 : vector<1x224xf32> to vector<28x224xf32>
    %5 = arith.addf %2, %4 : vector<28x224xf32>
    %cst_5 = arith.constant 0.000000e+00 : f32
    %6 = vector.broadcast %cst_5 : f32 to vector<28x224xf32>
    %7 = arith.maximumf %5, %6 : vector<28x224xf32>
    %8 = vector.extract_strided_slice %7 {offsets = [0, 0], sizes = [28, 208], strides = [1, 1]} : vector<28x224xf32> to vector<28x208xf32>
    %9 = vector.extract_strided_slice %7 {offsets = [0, 16], sizes = [28, 208], strides = [1, 1]} : vector<28x224xf32> to vector<28x208xf32>
    %10 = arith.maximumf %8, %9 : vector<28x208xf32>
    %11 = vector.extract_strided_slice %10 {offsets = [0, 0], sizes = [14, 208], strides = [1, 1]} : vector<28x208xf32> to vector<14x208xf32>
    %12 = vector.extract_strided_slice %10 {offsets = [14, 0], sizes = [14, 208], strides = [1, 1]} : vector<28x208xf32> to vector<14x208xf32>
    %13 = arith.maximumf %11, %12 : vector<14x208xf32>
    %14 = vector.extract_strided_slice %12 {offsets = [0, 0], sizes = [6, 208], strides = [1, 1]} : vector<14x208xf32> to vector<6x208xf32>
    %15 = vector.extract_strided_slice %11 {offsets = [1, 0], sizes = [6, 208], strides = [1, 1]} : vector<14x208xf32> to vector<6x208xf32>
    %16 = arith.maximumf %14, %15 : vector<6x208xf32>
    %17 = vector.extract_strided_slice %13 {offsets = [0, 0], sizes = [5, 208], strides = [1, 1]} : vector<14x208xf32> to vector<5x208xf32>
    %c0_6 = arith.constant 0 : index
    %c0_7 = arith.constant 0 : index
    %18 = vector.load %arg10[%c0_6, %c0_7] : memref<10x832xf32, #tpu.memory_space<vmem>>, vector<5x208xf32>
    tpu.vector_store %arg10[%c0_6, %c0_7], %17 {strides = array<i32>} : memref<10x832xf32, #tpu.memory_space<vmem>>, vector<5x208xf32>,
    %19 = vector.extract_strided_slice %16 {offsets = [0, 0], sizes = [5, 208], strides = [1, 1]} : vector<6x208xf32> to vector<5x208xf32>
    %c0_8 = arith.constant 0 : index
    %c208 = arith.constant 208 : index
    %20 = vector.load %arg10[%c0_8, %c208] : memref<10x832xf32, #tpu.memory_space<vmem>>, vector<5x208xf32>
    tpu.vector_store %arg10[%c0_8, %c208], %19 {strides = array<i32>} : memref<10x832xf32, #tpu.memory_space<vmem>>, vector<5x208xf32>,
    %21 = vector.extract_strided_slice %13 {offsets = [1, 0], sizes = [5, 208], strides = [1, 1]} : vector<14x208xf32> to vector<5x208xf32>
    %c0_9 = arith.constant 0 : index
    %c416 = arith.constant 416 : index
    %22 = vector.load %arg10[%c0_9, %c416] : memref<10x832xf32, #tpu.memory_space<vmem>>, vector<5x208xf32>
    tpu.vector_store %arg10[%c0_9, %c416], %21 {strides = array<i32>} : memref<10x832xf32, #tpu.memory_space<vmem>>, vector<5x208xf32>,
    %23 = vector.extract_strided_slice %16 {offsets = [1, 0], sizes = [5, 208], strides = [1, 1]} : vector<6x208xf32> to vector<5x208xf32>
    %c0_10 = arith.constant 0 : index
    %c624 = arith.constant 624 : index
    %24 = vector.load %arg10[%c0_10, %c624] : memref<10x832xf32, #tpu.memory_space<vmem>>, vector<5x208xf32>
    tpu.vector_store %arg10[%c0_10, %c624], %23 {strides = array<i32>} : memref<10x832xf32, #tpu.memory_space<vmem>>, vector<5x208xf32>,
    %25 = vector.extract_strided_slice %12 {offsets = [7, 0], sizes = [6, 208], strides = [1, 1]} : vector<14x208xf32> to vector<6x208xf32>
    %26 = vector.extract_strided_slice %11 {offsets = [8, 0], sizes = [6, 208], strides = [1, 1]} : vector<14x208xf32> to vector<6x208xf32>
    %27 = arith.maximumf %25, %26 : vector<6x208xf32>
    %28 = vector.extract_strided_slice %13 {offsets = [7, 0], sizes = [5, 208], strides = [1, 1]} : vector<14x208xf32> to vector<5x208xf32>
    %c5 = arith.constant 5 : index
    %c0_11 = arith.constant 0 : index
    %29 = vector.load %arg10[%c5, %c0_11] : memref<10x832xf32, #tpu.memory_space<vmem>>, vector<5x208xf32>
    tpu.vector_store %arg10[%c5, %c0_11], %28 {strides = array<i32>} : memref<10x832xf32, #tpu.memory_space<vmem>>, vector<5x208xf32>,
    %30 = vector.extract_strided_slice %27 {offsets = [0, 0], sizes = [5, 208], strides = [1, 1]} : vector<6x208xf32> to vector<5x208xf32>
    %c5_12 = arith.constant 5 : index
    %c208_13 = arith.constant 208 : index
    %31 = vector.load %arg10[%c5_12, %c208_13] : memref<10x832xf32, #tpu.memory_space<vmem>>, vector<5x208xf32>
    tpu.vector_store %arg10[%c5_12, %c208_13], %30 {strides = array<i32>} : memref<10x832xf32, #tpu.memory_space<vmem>>, vector<5x208xf32>,
    %32 = vector.extract_strided_slice %13 {offsets = [8, 0], sizes = [5, 208], strides = [1, 1]} : vector<14x208xf32> to vector<5x208xf32>
    %c5_14 = arith.constant 5 : index
    %c416_15 = arith.constant 416 : index
    %33 = vector.load %arg10[%c5_14, %c416_15] : memref<10x832xf32, #tpu.memory_space<vmem>>, vector<5x208xf32>
    tpu.vector_store %arg10[%c5_14, %c416_15], %32 {strides = array<i32>} : memref<10x832xf32, #tpu.memory_space<vmem>>, vector<5x208xf32>,
    %34 = vector.extract_strided_slice %27 {offsets = [1, 0], sizes = [5, 208], strides = [1, 1]} : vector<6x208xf32> to vector<5x208xf32>
    %c5_16 = arith.constant 5 : index
    %c624_17 = arith.constant 624 : index
    %35 = vector.load %arg10[%c5_16, %c624_17] : memref<10x832xf32, #tpu.memory_space<vmem>>, vector<5x208xf32>
    tpu.vector_store %arg10[%c5_16, %c624_17], %34 {strides = array<i32>} : memref<10x832xf32, #tpu.memory_space<vmem>>, vector<5x208xf32>,
    %c0_18 = arith.constant 0 : index
    %c0_19 = arith.constant 0 : index
    %36 = vector.load %arg10[%c0_18, %c0_19] : memref<10x832xf32, #tpu.memory_space<vmem>>, vector<10x832xf32>
    %37 = arith.truncf %36 : vector<10x832xf32> to vector<10x832xbf16>
    %c0_20 = arith.constant 0 : index
    %c0_21 = arith.constant 0 : index
    %38 = vector.load %arg3[%c0_20, %c0_21] : memref<832x160xbf16, #tpu.memory_space<vmem>>, vector<832x160xbf16>
    %cst_22 = arith.constant dense<0.000000e+00> : vector<10x160xf32>
    %39 = tpu.matmul %37, %38, %cst_22 {dimension_numbers = #tpu.dot_dimension_numbers<[1], [0], [0], [1], [0, 0, 1, 1], [], []>} : vector<10x832xbf16>, vector<832x160xbf16>, vector<10x160xf32> -> vector<10x160xf32>
    %c0_23 = arith.constant 0 : index
    %c0_24 = arith.constant 0 : index
    %40 = vector.load %arg4[%c0_23, %c0_24] : memref<1x160xf32, #tpu.memory_space<vmem>>, vector<1x160xf32>
    %41 = vector.broadcast %40 : vector<1x160xf32> to vector<10x160xf32>
    %42 = arith.addf %39, %41 : vector<10x160xf32>
    %cst_25 = arith.constant 0.000000e+00 : f32
    %43 = vector.broadcast %cst_25 : f32 to vector<10x160xf32>
    %44 = arith.maximumf %42, %43 : vector<10x160xf32>
    %45 = vector.extract_strided_slice %44 {offsets = [0, 0], sizes = [10, 128], strides = [1, 1]} : vector<10x160xf32> to vector<10x128xf32>
    %46 = vector.extract_strided_slice %44 {offsets = [0, 32], sizes = [10, 128], strides = [1, 1]} : vector<10x160xf32> to vector<10x128xf32>
    %47 = arith.maximumf %45, %46 : vector<10x128xf32>
    %48 = vector.extract_strided_slice %47 {offsets = [0, 0], sizes = [5, 128], strides = [1, 1]} : vector<10x128xf32> to vector<5x128xf32>
    %49 = vector.extract_strided_slice %48 {offsets = [0, 0], sizes = [4, 128], strides = [1, 1]} : vector<5x128xf32> to vector<4x128xf32>
    %50 = vector.extract_strided_slice %48 {offsets = [1, 0], sizes = [4, 128], strides = [1, 1]} : vector<5x128xf32> to vector<4x128xf32>
    %51 = arith.maximumf %49, %50 : vector<4x128xf32>
    %52 = vector.extract_strided_slice %51 {offsets = [0, 0], sizes = [1, 128], strides = [1, 1]} : vector<4x128xf32> to vector<1x128xf32>
    %c0_26 = arith.constant 0 : index
    %c0_27 = arith.constant 0 : index
    %53 = vector.load %arg11[%c0_26, %c0_27] : memref<2x512xf32, #tpu.memory_space<vmem>>, vector<1x128xf32>
    tpu.vector_store %arg11[%c0_26, %c0_27], %52 {strides = array<i32>} : memref<2x512xf32, #tpu.memory_space<vmem>>, vector<1x128xf32>,
    %54 = vector.extract_strided_slice %51 {offsets = [1, 0], sizes = [1, 128], strides = [1, 1]} : vector<4x128xf32> to vector<1x128xf32>
    %c0_28 = arith.constant 0 : index
    %c128 = arith.constant 128 : index
    %55 = vector.load %arg11[%c0_28, %c128] : memref<2x512xf32, #tpu.memory_space<vmem>>, vector<1x128xf32>
    tpu.vector_store %arg11[%c0_28, %c128], %54 {strides = array<i32>} : memref<2x512xf32, #tpu.memory_space<vmem>>, vector<1x128xf32>,
    %56 = vector.extract_strided_slice %51 {offsets = [2, 0], sizes = [1, 128], strides = [1, 1]} : vector<4x128xf32> to vector<1x128xf32>
    %c0_29 = arith.constant 0 : index
    %c256 = arith.constant 256 : index
    %57 = vector.load %arg11[%c0_29, %c256] : memref<2x512xf32, #tpu.memory_space<vmem>>, vector<1x128xf32>
    tpu.vector_store %arg11[%c0_29, %c256], %56 {strides = array<i32>} : memref<2x512xf32, #tpu.memory_space<vmem>>, vector<1x128xf32>,
    %58 = vector.extract_strided_slice %51 {offsets = [3, 0], sizes = [1, 128], strides = [1, 1]} : vector<4x128xf32> to vector<1x128xf32>
    %c0_30 = arith.constant 0 : index
    %c384 = arith.constant 384 : index
    %59 = vector.load %arg11[%c0_30, %c384] : memref<2x512xf32, #tpu.memory_space<vmem>>, vector<1x128xf32>
    tpu.vector_store %arg11[%c0_30, %c384], %58 {strides = array<i32>} : memref<2x512xf32, #tpu.memory_space<vmem>>, vector<1x128xf32>,
    %60 = vector.extract_strided_slice %47 {offsets = [5, 0], sizes = [5, 128], strides = [1, 1]} : vector<10x128xf32> to vector<5x128xf32>
    %61 = vector.extract_strided_slice %60 {offsets = [0, 0], sizes = [4, 128], strides = [1, 1]} : vector<5x128xf32> to vector<4x128xf32>
    %62 = vector.extract_strided_slice %60 {offsets = [1, 0], sizes = [4, 128], strides = [1, 1]} : vector<5x128xf32> to vector<4x128xf32>
    %63 = arith.maximumf %61, %62 : vector<4x128xf32>
    %64 = vector.extract_strided_slice %63 {offsets = [0, 0], sizes = [1, 128], strides = [1, 1]} : vector<4x128xf32> to vector<1x128xf32>
    %c1 = arith.constant 1 : index
    %c0_31 = arith.constant 0 : index
    %65 = vector.load %arg11[%c1, %c0_31] : memref<2x512xf32, #tpu.memory_space<vmem>>, vector<1x128xf32>
    tpu.vector_store %arg11[%c1, %c0_31], %64 {strides = array<i32>} : memref<2x512xf32, #tpu.memory_space<vmem>>, vector<1x128xf32>,
    %66 = vector.extract_strided_slice %63 {offsets = [1, 0], sizes = [1, 128], strides = [1, 1]} : vector<4x128xf32> to vector<1x128xf32>
    %c1_32 = arith.constant 1 : index
    %c128_33 = arith.constant 128 : index
    %67 = vector.load %arg11[%c1_32, %c128_33] : memref<2x512xf32, #tpu.memory_space<vmem>>, vector<1x128xf32>
    tpu.vector_store %arg11[%c1_32, %c128_33], %66 {strides = array<i32>} : memref<2x512xf32, #tpu.memory_space<vmem>>, vector<1x128xf32>,
    %68 = vector.extract_strided_slice %63 {offsets = [2, 0], sizes = [1, 128], strides = [1, 1]} : vector<4x128xf32> to vector<1x128xf32>
    %c1_34 = arith.constant 1 : index
    %c256_35 = arith.constant 256 : index
    %69 = vector.load %arg11[%c1_34, %c256_35] : memref<2x512xf32, #tpu.memory_space<vmem>>, vector<1x128xf32>
    tpu.vector_store %arg11[%c1_34, %c256_35], %68 {strides = array<i32>} : memref<2x512xf32, #tpu.memory_space<vmem>>, vector<1x128xf32>,
    %70 = vector.extract_strided_slice %63 {offsets = [3, 0], sizes = [1, 128], strides = [1, 1]} : vector<4x128xf32> to vector<1x128xf32>
    %c1_36 = arith.constant 1 : index
    %c384_37 = arith.constant 384 : index
    %71 = vector.load %arg11[%c1_36, %c384_37] : memref<2x512xf32, #tpu.memory_space<vmem>>, vector<1x128xf32>
    tpu.vector_store %arg11[%c1_36, %c384_37], %70 {strides = array<i32>} : memref<2x512xf32, #tpu.memory_space<vmem>>, vector<1x128xf32>,
    %c0_38 = arith.constant 0 : index
    %c0_39 = arith.constant 0 : index
    %72 = vector.load %arg11[%c0_38, %c0_39] : memref<2x512xf32, #tpu.memory_space<vmem>>, vector<2x512xf32>
    %73 = arith.truncf %72 : vector<2x512xf32> to vector<2x512xbf16>
    %c0_40 = arith.constant 0 : index
    %c0_41 = arith.constant 0 : index
    %74 = vector.load %arg5[%c0_40, %c0_41] : memref<512x32xbf16, #tpu.memory_space<vmem>>, vector<512x32xbf16>
    %cst_42 = arith.constant dense<0.000000e+00> : vector<2x32xf32>
    %75 = tpu.matmul %73, %74, %cst_42 {dimension_numbers = #tpu.dot_dimension_numbers<[1], [0], [0], [1], [0, 0, 1, 1], [], []>} : vector<2x512xbf16>, vector<512x32xbf16>, vector<2x32xf32> -> vector<2x32xf32>
    %c0_43 = arith.constant 0 : index
    %c0_44 = arith.constant 0 : index
    %76 = vector.load %arg6[%c0_43, %c0_44] : memref<1x32xf32, #tpu.memory_space<vmem>>, vector<1x32xf32>
    %77 = vector.broadcast %76 : vector<1x32xf32> to vector<2x32xf32>
    %78 = arith.addf %75, %77 : vector<2x32xf32>
    %cst_45 = arith.constant 0.000000e+00 : f32
    %79 = vector.broadcast %cst_45 : f32 to vector<2x32xf32>
    %80 = arith.maximumf %78, %79 : vector<2x32xf32>
    %81 = arith.truncf %80 : vector<2x32xf32> to vector<2x32xbf16>
    %c0_46 = arith.constant 0 : index
    %c0_47 = arith.constant 0 : index
    %82 = vector.load %arg7[%c0_46, %c0_47] : memref<32x128xbf16, #tpu.memory_space<vmem>>, vector<32x128xbf16>
    %cst_48 = arith.constant dense<0.000000e+00> : vector<2x128xf32>
    %83 = tpu.matmul %81, %82, %cst_48 {dimension_numbers = #tpu.dot_dimension_numbers<[1], [0], [0], [1], [0, 0, 1, 1], [], []>} : vector<2x32xbf16>, vector<32x128xbf16>, vector<2x128xf32> -> vector<2x128xf32>
    %c0_49 = arith.constant 0 : index
    %c0_50 = arith.constant 0 : index
    %84 = vector.load %arg8[%c0_49, %c0_50] : memref<1x128xf32, #tpu.memory_space<vmem>>, vector<1x128xf32>
    %85 = vector.broadcast %84 : vector<1x128xf32> to vector<2x128xf32>
    %86 = arith.addf %83, %85 : vector<2x128xf32>
    %c0_51 = arith.constant 0 : index
    %c0_52 = arith.constant 0 : index
    %87 = vector.load %arg9[%c0_51, %c0_52] : memref<2x128xf32, #tpu.memory_space<vmem>>, vector<2x128xf32>
    tpu.vector_store %arg9[%c0_51, %c0_52], %86 {strides = array<i32>} : memref<2x128xf32, #tpu.memory_space<vmem>>, vector<2x128xf32>,
    return
  }
}

</mosaic_0001>

<llo_original>
// kernel: sample_convnet_forward.1
$region0: #{sample_convnet_forward.1}
  #allocation0 [shape = 'u32[]', space=smem, size = 0x4, offset = 0x4, fixed_abs, tag = 'smem constant byte address 0x4 - core index']
  #allocation1 [shape = 'u32[72,128]{1,0:T(1,128)}', space=vmem, size = 0x9000, scoped, tag = 'internal scratch']
  #allocation2 [shape = 'f32[10,832]{1,0:T(8,128)}', space=vmem, size = 0xe000, scoped, tag = 'scratch operand']
  #allocation3 [shape = 'f32[2,512]{1,0:T(2,128)}', space=vmem, size = 0x1000, scoped, tag = 'scratch operand']
  %s0 = inlined_call_operand.vmem [shape: bf16[28,272], index: 0, kind: input, shape index: {}]
  %s1 = inlined_call_operand.vmem [shape: bf16[272,224], index: 1, kind: input, shape index: {}]
  %s2 = inlined_call_operand.vmem [shape: f32[1,224], index: 2, kind: input, shape index: {}]
  %s3 = inlined_call_operand.vmem [shape: bf16[832,160], index: 3, kind: input, shape index: {}]
  %s4 = inlined_call_operand.vmem [shape: f32[1,160], index: 4, kind: input, shape index: {}]
  %s5 = inlined_call_operand.vmem [shape: bf16[512,32], index: 5, kind: input, shape index: {}]
  %s6 = inlined_call_operand.vmem [shape: f32[1,32], index: 6, kind: input, shape index: {}]
  %s7 = inlined_call_operand.vmem [shape: bf16[32,128], index: 7, kind: input, shape index: {}]
  %s8 = inlined_call_operand.vmem [shape: f32[1,128], index: 8, kind: input, shape index: {}]
  %s9 = inlined_call_operand.hbm [shape: f32[2,128], index: 9, kind: output, shape index: {}]
  %s10 = sld [smem:[#allocation0]]
  $region46: #{sample_convnet_forward.1} parent=0
    _
  %s12 = ssub.s32 1, %s10
  %s13 = scalar_select 0, %s12, %s10
  $region1: #{sample_convnet_forward.1} parent=0
    #allocation4 [shape = 'u8[1024]{0}', space=vmem, size = 0x400, scoped, tag = 'output window, operand 0, single buffered']
    #allocation5 [shape = 's32[1]{0}', space=sflag, size = 0x4, scoped, tag = 'scoped memory for sample_convnet_forward.1']
    %14 = vsyncpa [#allocation5], 0
    // Predicated region
    $region2: #{sample_convnet_forward.1} parent=1 // pred_check
      _
    $region3: #{sample_convnet_forward.1} parent=1 // pred_check_branch
      %16 = sbr.rel (0) target = $region5
    $region4: #{sample_convnet_forward.1} parent=1 // pred_region
      _
    $region5: #{sample_convnet_forward.1} parent=1 // pred_fallthru
      _
    // Predicated region
    $region6: #{sample_convnet_forward.1} parent=1 // pred_check
      _
    $region7: #{sample_convnet_forward.1} parent=1 // pred_check_branch
      %18 = sbr.rel (0) target = $region9
    $region8: #{sample_convnet_forward.1} parent=1 // pred_region
      _
    $region9: #{sample_convnet_forward.1} parent=1 // pred_fallthru
      _
    // Predicated region
    $region10: #{sample_convnet_forward.1} parent=1 // pred_check
      _
    $region11: #{sample_convnet_forward.1} parent=1 // pred_check_branch
      %20 = sbr.rel (0) target = $region13
    $region12: #{sample_convnet_forward.1} parent=1 // pred_region
      _
    $region13: #{sample_convnet_forward.1} parent=1 // pred_fallthru
      _
    // Predicated region
    $region14: #{sample_convnet_forward.1} parent=1 // pred_check
      _
    $region15: #{sample_convnet_forward.1} parent=1 // pred_check_branch
      %22 = sbr.rel (0) target = $region17
    $region16: #{sample_convnet_forward.1} parent=1 // pred_region
      _
    $region17: #{sample_convnet_forward.1} parent=1 // pred_fallthru
      _
    // Predicated region
    $region18: #{sample_convnet_forward.1} parent=1 // pred_check
      _
    $region19: #{sample_convnet_forward.1} parent=1 // pred_check_branch
      %24 = sbr.rel (0) target = $region21
    $region20: #{sample_convnet_forward.1} parent=1 // pred_region
      _
    $region21: #{sample_convnet_forward.1} parent=1 // pred_fallthru
      _
    // Predicated region
    $region22: #{sample_convnet_forward.1} parent=1 // pred_check
      _
    $region23: #{sample_convnet_forward.1} parent=1 // pred_check_branch
      %26 = sbr.rel (0) target = $region25
    $region24: #{sample_convnet_forward.1} parent=1 // pred_region
      _
    $region25: #{sample_convnet_forward.1} parent=1 // pred_fallthru
      _
    // Predicated region
    $region26: #{sample_convnet_forward.1} parent=1 // pred_check
      _
    $region27: #{sample_convnet_forward.1} parent=1 // pred_check_branch
      %28 = sbr.rel (0) target = $region29
    $region28: #{sample_convnet_forward.1} parent=1 // pred_region
      _
    $region29: #{sample_convnet_forward.1} parent=1 // pred_fallthru
      _
    // Predicated region
    $region30: #{sample_convnet_forward.1} parent=1 // pred_check
      _
    $region31: #{sample_convnet_forward.1} parent=1 // pred_check_branch
      %30 = sbr.rel (0) target = $region33
    $region32: #{sample_convnet_forward.1} parent=1 // pred_region
      _
    $region33: #{sample_convnet_forward.1} parent=1 // pred_fallthru
      _
    // Predicated region
    $region34: #{sample_convnet_forward.1} parent=1 // pred_check
      _
    $region35: #{sample_convnet_forward.1} parent=1 // pred_check_branch
      %32 = sbr.rel (0) target = $region37
    $region36: #{sample_convnet_forward.1} parent=1 // pred_region
      _
    $region37: #{sample_convnet_forward.1} parent=1 // pred_fallthru
      _
    %v34 = vld [vmem:[%s0] sm:$0xff]
    %v35 = vld [vmem:[%s0 + $0x8] sm:$0xf]
    %v36 = vld [vmem:[%s0 + $0xc] sm:$0xff]
    %v37 = vld [vmem:[%s0 + $0x14] sm:$0xf]
    %v38 = vld [vmem:[%s0 + $0x18] sm:$0xff]
    %v39 = vld [vmem:[%s0 + $0x20] sm:$0xf]
    %v40 = vld [vmem:[%s0 + $0x24] sm:$0x33]
    %v41 = vld [vmem:[%s0 + $0x2c] sm:$0x3]
    %v42 = vld [vmem:[%s1] sm:$0xff]
    %v43 = vld [vmem:[%s1 + $0x8] sm:$0xff]
    %v44 = vld [vmem:[%s1 + $0x10] sm:$0xff]
    %v45 = vld [vmem:[%s1 + $0x18] sm:$0xff]
    %v46 = vld [vmem:[%s1 + $0x20] sm:$0xff]
    %v47 = vld [vmem:[%s1 + $0x28] sm:$0xff]
    %v48 = vld [vmem:[%s1 + $0x30] sm:$0xff]
    %v49 = vld [vmem:[%s1 + $0x38] sm:$0xff]
    %v50 = vld [vmem:[%s1 + $0x40] sm:$0xff]
    %v51 = vld [vmem:[%s1 + $0x48] sm:$0xff]
    %v52 = vld [vmem:[%s1 + $0x50] sm:$0xff]
    %v53 = vld [vmem:[%s1 + $0x58] sm:$0xff]
    %v54 = vld [vmem:[%s1 + $0x60] sm:$0xff]
    %v55 = vld [vmem:[%s1 + $0x68] sm:$0xff]
    %v56 = vld [vmem:[%s1 + $0x70] sm:$0xff]
    %v57 = vld [vmem:[%s1 + $0x78] sm:$0xff]
    %v58 = vld [vmem:[%s1 + $0x80] sm:$0xff]
    %v59 = vld [vmem:[%s1 + $0x88] sm:$0xff]
    %v60 = vld [vmem:[%s1 + $0x90] sm:$0xff]
    %v61 = vld [vmem:[%s1 + $0x98] sm:$0xff]
    %v62 = vld [vmem:[%s1 + $0xa0] sm:$0xff]
    %v63 = vld [vmem:[%s1 + $0xa8] sm:$0xff]
    %v64 = vld [vmem:[%s1 + $0xb0] sm:$0xff]
    %v65 = vld [vmem:[%s1 + $0xb8] sm:$0xff]
    %v66 = vld [vmem:[%s1 + $0xc0] sm:$0xff]
    %v67 = vld [vmem:[%s1 + $0xc8] sm:$0xff]
    %v68 = vld [vmem:[%s1 + $0xd0] sm:$0xff]
    %v69 = vld [vmem:[%s1 + $0xd8] sm:$0xff]
    %v70 = vld [vmem:[%s1 + $0xe0] sm:$0xff]
    %v71 = vld [vmem:[%s1 + $0xe8] sm:$0xff]
    %v72 = vld [vmem:[%s1 + $0xf0] sm:$0xff]
    %v73 = vld [vmem:[%s1 + $0xf8] sm:$0xff]
    %v74 = vld [vmem:[%s1 + $0x100] sm:$0xff]
    %v75 = vld [vmem:[%s1 + $0x108] sm:$0xff]
    %v76 = vld [vmem:[%s2] sm:$0x3]
    %v78 = vperm.slane %v76, 0
    %v79 = vperm.slane %v76, 1
    %v90 = vunpack.c.l.b16 %v34
    %v91 = vunpack.c.h.b16 %v34
    %v92 = vunpack.c.l.b16 %v35
    %v93 = vunpack.c.l.b16 %v36
    %v94 = vunpack.c.h.b16 %v36
    %v95 = vunpack.c.l.b16 %v37
    %v96 = vunpack.c.l.b16 %v38
    %v97 = vunpack.c.h.b16 %v38
    %v98 = vunpack.c.l.b16 %v39
    %v99 = vunpack.c.l.b16 %v40
    %v100 = vunpack.c.h.b16 %v40
    %v101 = vunpack.c.l.b16 %v41
    %v102 = vpack.c.b16 %v93, %v90
    %v103 = vpack.c.b16 %v94, %v91
    %v104 = vpack.c.b16 %v95, %v92
    %v105 = vpack.c.b16 %v99, %v96
    %v106 = vpack.c.b16 %v100, %v97
    %v107 = vpack.c.b16 %v101, %v98
    %v146 = vunpack.c.l.b16 %v42
    %v147 = vunpack.c.h.b16 %v42
    %v148 = vunpack.c.l.b16 %v43
    %v149 = vunpack.c.h.b16 %v43
    %v150 = vunpack.c.l.b16 %v44
    %v151 = vunpack.c.h.b16 %v44
    %v152 = vunpack.c.l.b16 %v45
    %v153 = vunpack.c.h.b16 %v45
    %v154 = vunpack.c.l.b16 %v46
    %v155 = vunpack.c.h.b16 %v46
    %v156 = vunpack.c.l.b16 %v47
    %v157 = vunpack.c.h.b16 %v47
    %v158 = vunpack.c.l.b16 %v48
    %v159 = vunpack.c.h.b16 %v48
    %v160 = vunpack.c.l.b16 %v49
    %v161 = vunpack.c.h.b16 %v49
    %v162 = vunpack.c.l.b16 %v50
    %v163 = vunpack.c.h.b16 %v50
    %v164 = vunpack.c.l.b16 %v51
    %v165 = vunpack.c.h.b16 %v51
    %v166 = vunpack.c.l.b16 %v52
    %v167 = vunpack.c.h.b16 %v52
    %v168 = vunpack.c.l.b16 %v53
    %v169 = vunpack.c.h.b16 %v53
    %v170 = vunpack.c.l.b16 %v54
    %v171 = vunpack.c.h.b16 %v54
    %v172 = vunpack.c.l.b16 %v55
    %v173 = vunpack.c.h.b16 %v55
    %v174 = vunpack.c.l.b16 %v56
    %v175 = vunpack.c.h.b16 %v56
    %v176 = vunpack.c.l.b16 %v57
    %v177 = vunpack.c.h.b16 %v57
    %v178 = vunpack.c.l.b16 %v58
    %v179 = vunpack.c.h.b16 %v58
    %v180 = vunpack.c.l.b16 %v59
    %v181 = vunpack.c.h.b16 %v59
    %v182 = vunpack.c.l.b16 %v60
    %v183 = vunpack.c.h.b16 %v60
    %v184 = vunpack.c.l.b16 %v61
    %v185 = vunpack.c.h.b16 %v61
    %v186 = vunpack.c.l.b16 %v62
    %v187 = vunpack.c.h.b16 %v62
    %v188 = vunpack.c.l.b16 %v63
    %v189 = vunpack.c.h.b16 %v63
    %v190 = vunpack.c.l.b16 %v64
    %v191 = vunpack.c.h.b16 %v64
    %v192 = vunpack.c.l.b16 %v65
    %v193 = vunpack.c.h.b16 %v65
    %v194 = vunpack.c.l.b16 %v66
    %v195 = vunpack.c.h.b16 %v66
    %v196 = vunpack.c.l.b16 %v67
    %v197 = vunpack.c.h.b16 %v67
    %v198 = vunpack.c.l.b16 %v68
    %v199 = vunpack.c.h.b16 %v68
    %v200 = vunpack.c.l.b16 %v69
    %v201 = vunpack.c.h.b16 %v69
    %v202 = vunpack.c.l.b16 %v70
    %v203 = vunpack.c.h.b16 %v70
    %v204 = vunpack.c.l.b16 %v71
    %v205 = vunpack.c.h.b16 %v71
    %v206 = vunpack.c.l.b16 %v72
    %v207 = vunpack.c.h.b16 %v72
    %v208 = vunpack.c.l.b16 %v73
    %v209 = vunpack.c.h.b16 %v73
    %v210 = vunpack.c.l.b16 %v74
    %v211 = vunpack.c.h.b16 %v74
    %v212 = vunpack.c.l.b16 %v75
    %v213 = vunpack.c.h.b16 %v75
    %v214 = vpack.c.b16 %v148, %v146
    %v215 = vpack.c.b16 %v149, %v147
    %v216 = vpack.c.b16 %v152, %v150
    %v217 = vpack.c.b16 %v153, %v151
    %v218 = vpack.c.b16 %v156, %v154
    %v219 = vpack.c.b16 %v157, %v155
    %v220 = vpack.c.b16 %v160, %v158
    %v221 = vpack.c.b16 %v161, %v159
    %v222 = vpack.c.b16 %v164, %v162
    %v223 = vpack.c.b16 %v165, %v163
    %v224 = vpack.c.b16 %v168, %v166
    %v225 = vpack.c.b16 %v169, %v167
    %v226 = vpack.c.b16 %v172, %v170
    %v227 = vpack.c.b16 %v173, %v171
    %v228 = vpack.c.b16 %v176, %v174
    %v229 = vpack.c.b16 %v177, %v175
    %v230 = vpack.c.b16 %v180, %v178
    %v231 = vpack.c.b16 %v181, %v179
    %v232 = vpack.c.b16 %v184, %v182
    %v233 = vpack.c.b16 %v185, %v183
    %v234 = vpack.c.b16 %v188, %v186
    %v235 = vpack.c.b16 %v189, %v187
    %v236 = vpack.c.b16 %v192, %v190
    %v237 = vpack.c.b16 %v193, %v191
    %v238 = vpack.c.b16 %v196, %v194
    %v239 = vpack.c.b16 %v197, %v195
    %v240 = vpack.c.b16 %v200, %v198
    %v241 = vpack.c.b16 %v201, %v199
    %v242 = vpack.c.b16 %v204, %v202
    %v243 = vpack.c.b16 %v205, %v203
    %v244 = vpack.c.b16 %v208, %v206
    %v245 = vpack.c.b16 %v209, %v207
    %v246 = vpack.c.b16 %v212, %v210
    %v247 = vpack.c.b16 %v213, %v211
    %vm282 = vcmask 130048
    %v284 = vsel %vm282, %v104, 0
    %v287 = vsel %vm282, %v107, 0
    %289 = vmatpush.bf16.msra.mxu0 %v228
    %290 = vmatpush.bf16.msra.mxu0 %v226
    %291 = vmatpush.bf16.msra.mxu0 %v224
    %292 = vmatpush.bf16.msra.mxu0 %v222
    %293 = vmatpush.bf16.msra.mxu0 %v220
    %294 = vmatpush.bf16.msra.mxu0 %v218
    %295 = vmatpush.bf16.msra.mxu0 %v216
    %296 = vmatpush.bf16.msra.mxu0 %v214
    %297 = vmatmul.bf16.gmra.mxu0 %v102
    %v298 = vpop.f32.mrf.mxu0
    %v299 = vadd.f32 %v78, %v298
    %v300 = vpop.f32.mrf.mxu0
    %v301 = vadd.f32 %v78, %v300
    %302 = vmatmul.bf16.gmra.mxu0 %v105
    %v303 = vpop.f32.mrf.mxu0
    %v304 = vadd.f32 %v78, %v303
    %v305 = vpop.f32.mrf.mxu0
    %v306 = vadd.f32 %v78, %v305
    %307 = vdwg.mxu0
    %308 = vmatpush.bf16.msra.mxu0 %v244
    %309 = vmatpush.bf16.msra.mxu0 %v242
    %310 = vmatpush.bf16.msra.mxu0 %v240
    %311 = vmatpush.bf16.msra.mxu0 %v238
    %312 = vmatpush.bf16.msra.mxu0 %v236
    %313 = vmatpush.bf16.msra.mxu0 %v234
    %314 = vmatpush.bf16.msra.mxu0 %v232
    %315 = vmatpush.bf16.msra.mxu0 %v230
    %316 = vmatmul.bf16.gmra.mxu0 %v103
    %v317 = vpop.f32.mrf.mxu0
    %v318 = vadd.f32 %v299, %v317
    %v319 = vpop.f32.mrf.mxu0
    %v320 = vadd.f32 %v301, %v319
    %321 = vmatmul.bf16.gmra.mxu0 %v106
    %v322 = vpop.f32.mrf.mxu0
    %v323 = vadd.f32 %v304, %v322
    %v324 = vpop.f32.mrf.mxu0
    %v325 = vadd.f32 %v306, %v324
    %326 = vdwg.mxu0
    %327 = vmatpush.bf16.msra.mxu0 0
    %328 = vmatpush.bf16.msra.mxu0 0
    %329 = vmatpush.bf16.msra.mxu0 0
    %330 = vmatpush.bf16.msra.mxu0 0
    %331 = vmatpush.bf16.msra.mxu0 0
    %332 = vmatpush.bf16.msra.mxu0 0
    %333 = vmatpush.bf16.msra.mxu0 0
    %334 = vmatpush.bf16.msra.mxu0 %v246
    %335 = vmatmul.bf16.gmra.mxu0 %v284
    %v336 = vpop.f32.mrf.mxu0
    %v337 = vadd.f32 %v318, %v336
    %v338 = vpop.f32.mrf.mxu0
    %v339 = vadd.f32 %v320, %v338
    %340 = vmatmul.bf16.gmra.mxu0 %v287
    %v341 = vpop.f32.mrf.mxu0
    %v342 = vadd.f32 %v323, %v341
    %v343 = vpop.f32.mrf.mxu0
    %v344 = vadd.f32 %v325, %v343
    %345 = vdwg.mxu0
    %346 = vmatpush.bf16.msra.mxu0 %v229
    %347 = vmatpush.bf16.msra.mxu0 %v227
    %348 = vmatpush.bf16.msra.mxu0 %v225
    %349 = vmatpush.bf16.msra.mxu0 %v223
    %350 = vmatpush.bf16.msra.mxu0 %v221
    %351 = vmatpush.bf16.msra.mxu0 %v219
    %352 = vmatpush.bf16.msra.mxu0 %v217
    %353 = vmatpush.bf16.msra.mxu0 %v215
    %354 = vmatmul.bf16.gmra.mxu0 %v102
    %v355 = vpop.f32.mrf.mxu0
    %v356 = vadd.f32 %v79, %v355
    %v357 = vpop.f32.mrf.mxu0
    %v358 = vadd.f32 %v79, %v357
    %359 = vmatmul.bf16.gmra.mxu0 %v105
    %v360 = vpop.f32.mrf.mxu0
    %v361 = vadd.f32 %v79, %v360
    %v362 = vpop.f32.mrf.mxu0
    %v363 = vadd.f32 %v79, %v362
    %364 = vdwg.mxu0
    %365 = vmatpush.bf16.msra.mxu0 %v245
    %366 = vmatpush.bf16.msra.mxu0 %v243
    %367 = vmatpush.bf16.msra.mxu0 %v241
    %368 = vmatpush.bf16.msra.mxu0 %v239
    %369 = vmatpush.bf16.msra.mxu0 %v237
    %370 = vmatpush.bf16.msra.mxu0 %v235
    %371 = vmatpush.bf16.msra.mxu0 %v233
    %372 = vmatpush.bf16.msra.mxu0 %v231
    %373 = vmatmul.bf16.gmra.mxu0 %v103
    %v374 = vpop.f32.mrf.mxu0
    %v375 = vadd.f32 %v356, %v374
    %v376 = vpop.f32.mrf.mxu0
    %v377 = vadd.f32 %v358, %v376
    %378 = vmatmul.bf16.gmra.mxu0 %v106
    %v379 = vpop.f32.mrf.mxu0
    %v380 = vadd.f32 %v361, %v379
    %v381 = vpop.f32.mrf.mxu0
    %v382 = vadd.f32 %v363, %v381
    %383 = vdwg.mxu0
    %384 = vmatpush.bf16.msra.mxu0 0
    %385 = vmatpush.bf16.msra.mxu0 0
    %386 = vmatpush.bf16.msra.mxu0 0
    %387 = vmatpush.bf16.msra.mxu0 0
    %388 = vmatpush.bf16.msra.mxu0 0
    %389 = vmatpush.bf16.msra.mxu0 0
    %390 = vmatpush.bf16.msra.mxu0 0
    %391 = vmatpush.bf16.msra.mxu0 %v247
    %392 = vmatmul.bf16.gmra.mxu0 %v284
    %v393 = vpop.f32.mrf.mxu0
    %v394 = vadd.f32 %v375, %v393
    %v395 = vpop.f32.mrf.mxu0
    %v396 = vadd.f32 %v377, %v395
    %397 = vmatmul.bf16.gmra.mxu0 %v287
    %v398 = vpop.f32.mrf.mxu0
    %v399 = vadd.f32 %v380, %v398
    %v400 = vpop.f32.mrf.mxu0
    %v401 = vadd.f32 %v382, %v400
    %402 = vdwg.mxu0
    %v403 = vmax.f32 %v337, 0.0
    %v404 = vmax.f32 %v394, 0.0
    %v405 = vmax.f32 %v339, 0.0
    %v406 = vmax.f32 %v396, 0.0
    %v407 = vmax.f32 %v342, 0.0
    %v408 = vmax.f32 %v399, 0.0
    %v409 = vmax.f32 %v344, 0.0
    %v410 = vmax.f32 %v401, 0.0
    %419 = vrot.lane.b32.xlu0 %v403, 112
    %v420 = vpop.permute.xlu0 %419
    %421 = vrot.lane.b32.xlu0 %v404, 112
    %v422 = vpop.permute.xlu0 %421
    %423 = vrot.lane.b32.xlu0 %v405, 112
    %v424 = vpop.permute.xlu0 %423
    %425 = vrot.lane.b32.xlu0 %v406, 112
    %v426 = vpop.permute.xlu0 %425
    %427 = vrot.lane.b32.xlu0 %v407, 112
    %v428 = vpop.permute.xlu0 %427
    %429 = vrot.lane.b32.xlu0 %v408, 112
    %v430 = vpop.permute.xlu0 %429
    %431 = vrot.lane.b32.xlu0 %v409, 112
    %v432 = vpop.permute.xlu0 %431
    %433 = vrot.lane.b32.xlu0 %v410, 112
    %v434 = vpop.permute.xlu0 %433
    %vm435 = vcmask 916480
    %v436 = vsel %vm435, %v420, %v422
    %v437 = vsel %vm435, %v424, %v426
    %v438 = vsel %vm435, %v428, %v430
    %v439 = vsel %vm435, %v432, %v434
    %v448 = vmax.f32 %v403, %v436
    %v449 = vmax.f32 %v404, %v422
    %v450 = vmax.f32 %v405, %v437
    %v451 = vmax.f32 %v406, %v426
    %v452 = vmax.f32 %v407, %v438
    %v453 = vmax.f32 %v408, %v430
    %v454 = vmax.f32 %v409, %v439
    %v455 = vmax.f32 %v410, %v434
    %vm462 = vcmask 1041408
    %v463 = vrot.slane %v450, 6
    %v464 = vrot.slane %v452, 6
    %v465 = vsel %vm462, %v463, %v464
    %v466 = vrot.slane %v451, 6
    %v467 = vrot.slane %v453, 6
    %v468 = vsel %vm462, %v466, %v467
    %v469 = vrot.slane %v454, 6
    %v470 = vsel %vm462, %v464, %v469
    %v471 = vrot.slane %v455, 6
    %v472 = vsel %vm462, %v467, %v471
    %v477 = vmax.f32 %v448, %v465
    %v478 = vmax.f32 %v449, %v468
    %v479 = vmax.f32 %v450, %v470
    %v480 = vmax.f32 %v451, %v472
    %v483 = vrot.slane %v448, 3
    %v484 = vrot.slane %v449, 3
    %v487 = vmax.f32 %v450, %v483
    %v488 = vmax.f32 %v451, %v484
    %v489 = vmax.f32 %v452, %v483
    %v490 = vmax.f32 %v453, %v484
    %491 = vst [vmem:[#allocation2] sm:$0x1f] %v477
    %vm492 = vcmask 651264
    %493 = vst.msk [vmem:[#allocation2 + $0x8] sm:$0x1f] %vm492, %v478
    %v498 = vrot.slane %v487, 6
    %v499 = vrot.slane %v489, 6
    %v500 = vsel %vm462, %v498, %v499
    %v501 = vrot.slane %v488, 6
    %v502 = vrot.slane %v490, 6
    %v503 = vsel %vm462, %v501, %v502
    %504 = vrot.lane.b32.xlu0 %v500, 80
    %v505 = vpop.permute.xlu0 %504
    %506 = vrot.lane.b32.xlu0 %v503, 80
    %v507 = vpop.permute.xlu0 %506
    %vm508 = vcmask 654336
    %v509 = vsel %vm508, %v505, %v507
    %vm513 = vcmask 1045120
    %514 = vst.msk [vmem:[#allocation2 + $0x8] sm:$0x1f] %vm513, %v505
    %515 = vst [vmem:[#allocation2 + $0x10] sm:$0x1f] %v509
    %vm516 = vcmask 258048
    %517 = vst.msk [vmem:[#allocation2 + $0x18] sm:$0x1f] %vm516, %v507
    %v520 = vrot.slane %v477, 1
    %v521 = vrot.slane %v478, 1
    %522 = vrot.lane.b32.xlu0 %v520, 32
    %v523 = vpop.permute.xlu0 %522
    %524 = vrot.lane.b32.xlu0 %v521, 32
    %v525 = vpop.permute.xlu0 %524
    %vm526 = vcmask 261120
    %v527 = vsel %vm526, %v523, %v525
    %vm530 = vcmask 1044736
    %531 = vst.msk [vmem:[#allocation2 + $0x18] sm:$0x1f] %vm530, %v523
    %vm532 = vcmask 913408
    %533 = vst.msk [vmem:[#allocation2 + $0x20] sm:$0x1f] %vm532, %v527
    %vm534 = vcmask 1040384
    %v535 = vrot.slane %v487, 7
    %v536 = vrot.slane %v489, 7
    %v537 = vsel %vm534, %v535, %v536
    %v538 = vrot.slane %v488, 7
    %v539 = vrot.slane %v490, 7
    %v540 = vsel %vm534, %v538, %v539
    %541 = vrot.lane.b32.xlu0 %v537, 112
    %v542 = vpop.permute.xlu0 %541
    %543 = vrot.lane.b32.xlu0 %v540, 112
    %v544 = vpop.permute.xlu0 %543
    %v545 = vsel %vm435, %v542, %v544
    %vm549 = vcmask 1045376
    %550 = vst.msk [vmem:[#allocation2 + $0x20] sm:$0x1f] %vm549, %v542
    %551 = vst [vmem:[#allocation2 + $0x28] sm:$0x1f] %v545
    %vm552 = vcmask 520192
    %553 = vst.msk [vmem:[#allocation2 + $0x30] sm:$0x1f] %vm552, %v544
    %v554 = vrot.slane %v450, 3
    %v555 = vrot.slane %v451, 3
    %v558 = vmax.f32 %v452, %v554
    %v559 = vmax.f32 %v453, %v555
    %v560 = vmax.f32 %v454, %v554
    %v561 = vmax.f32 %v455, %v555
    %vm564 = vcmask 1045504
    %v565 = vrot.slane %v477, 2
    %v566 = vrot.slane %v479, 2
    %v567 = vsel %vm564, %v565, %v566
    %v568 = vrot.slane %v478, 2
    %v569 = vrot.slane %v480, 2
    %v570 = vsel %vm564, %v568, %v569
    %575 = vst [vmem:[#allocation2] sm:$0xe0] %v567
    %vm576 = vcmask 654341
    %577 = vst.msk [vmem:[#allocation2 + $0x8] sm:$0xe0] %vm576, %v570
    %578 = vst [vmem:[#allocation2 + $0x38] sm:$0x3] %v566
    %vm579 = vcmask 648192
    %580 = vst.msk [vmem:[#allocation2 + $0x40] sm:$0x3] %vm579, %v569
    %585 = vrot.lane.b32.xlu0 %v558, 80
    %v586 = vpop.permute.xlu0 %585
    %587 = vrot.lane.b32.xlu0 %v559, 80
    %v588 = vpop.permute.xlu0 %587
    %589 = vrot.lane.b32.xlu0 %v560, 80
    %v590 = vpop.permute.xlu0 %589
    %591 = vrot.lane.b32.xlu0 %v561, 80
    %v592 = vpop.permute.xlu0 %591
    %v593 = vsel %vm508, %v586, %v588
    %v594 = vsel %vm508, %v590, %v592
    %vm601 = vcmask 1048197
    %602 = vst.msk [vmem:[#allocation2 + $0x8] sm:$0xe0] %vm601, %v586
    %603 = vst [vmem:[#allocation2 + $0x10] sm:$0xe0] %v593
    %vm604 = vcmask 261125
    %605 = vst.msk [vmem:[#allocation2 + $0x18] sm:$0xe0] %vm604, %v588
    %vm606 = vcmask 1042048
    %607 = vst.msk [vmem:[#allocation2 + $0x40] sm:$0x3] %vm606, %v590
    %608 = vst [vmem:[#allocation2 + $0x48] sm:$0x3] %v594
    %vm609 = vcmask 254976
    %610 = vst.msk [vmem:[#allocation2 + $0x50] sm:$0x3] %vm609, %v592
    %v611 = vrot.slane %v479, 3
    %v612 = vrot.slane %v480, 3
    %613 = vrot.lane.b32.xlu0 %v611, 32
    %v614 = vpop.permute.xlu0 %613
    %615 = vrot.lane.b32.xlu0 %v612, 32
    %v616 = vpop.permute.xlu0 %615
    %v617 = vsel %vm526, %v614, %v616
    %vm620 = vcmask 1047813
    %621 = vst.msk [vmem:[#allocation2 + $0x18] sm:$0xe0] %vm620, %v614
    %vm622 = vcmask 916485
    %623 = vst.msk [vmem:[#allocation2 + $0x20] sm:$0xe0] %vm622, %v617
    %vm624 = vcmask 1041664
    %625 = vst.msk [vmem:[#allocation2 + $0x50] sm:$0x3] %vm624, %v614
    %vm626 = vcmask 910336
    %627 = vst.msk [vmem:[#allocation2 + $0x58] sm:$0x3] %vm626, %v617
    %vm628 = vcmask 1046528
    %v629 = vrot.slane %v558, 1
    %v630 = vrot.slane %v560, 1
    %v631 = vsel %vm628, %v629, %v630
    %v632 = vrot.slane %v559, 1
    %v633 = vrot.slane %v561, 1
    %v634 = vsel %vm628, %v632, %v633
    %635 = vrot.lane.b32.xlu0 %v631, 112
    %v636 = vpop.permute.xlu0 %635
    %637 = vrot.lane.b32.xlu0 %v634, 112
    %v638 = vpop.permute.xlu0 %637
    %639 = vrot.lane.b32.xlu0 %v630, 112
    %v640 = vpop.permute.xlu0 %639
    %641 = vrot.lane.b32.xlu0 %v633, 112
    %v642 = vpop.permute.xlu0 %641
    %v643 = vsel %vm435, %v636, %v638
    %v644 = vsel %vm435, %v640, %v642
    %vm651 = vcmask 1048453
    %652 = vst.msk [vmem:[#allocation2 + $0x20] sm:$0xe0] %vm651, %v636
    %653 = vst [vmem:[#allocation2 + $0x28] sm:$0xe0] %v643
    %vm654 = vcmask 523269
    %655 = vst.msk [vmem:[#allocation2 + $0x30] sm:$0xe0] %vm654, %v638
    %vm656 = vcmask 1042304
    %657 = vst.msk [vmem:[#allocation2 + $0x58] sm:$0x3] %vm656, %v640
    %658 = vst [vmem:[#allocation2 + $0x60] sm:$0x3] %v644
    %vm659 = vcmask 517120
    %660 = vst.msk [vmem:[#allocation2 + $0x68] sm:$0x3] %vm659, %v642
    %v661 = vld [vmem:[#allocation2] sm:$0xff]
    %v662 = vld [vmem:[#allocation2 + $0x8] sm:$0xff]
    %v663 = vld [vmem:[#allocation2 + $0x10] sm:$0xff]
    %v664 = vld [vmem:[#allocation2 + $0x18] sm:$0xff]
    %v665 = vld [vmem:[#allocation2 + $0x20] sm:$0xff]
    %v666 = vld [vmem:[#allocation2 + $0x28] sm:$0xff]
    %v667 = vld [vmem:[#allocation2 + $0x30] sm:$0xff]
    %v668 = vld [vmem:[#allocation2 + $0x38] sm:$0x3]
    %v669 = vld [vmem:[#allocation2 + $0x40] sm:$0x3]
    %v670 = vld [vmem:[#allocation2 + $0x48] sm:$0x3]
    %v671 = vld [vmem:[#allocation2 + $0x50] sm:$0x3]
    %v672 = vld [vmem:[#allocation2 + $0x58] sm:$0x3]
    %v673 = vld [vmem:[#allocation2 + $0x60] sm:$0x3]
    %v674 = vld [vmem:[#allocation2 + $0x68] sm:$0x3]
    %v675 = vpack.c.bf16 %v668, %v661
    %v676 = vpack.c.bf16 %v669, %v662
    %v677 = vpack.c.bf16 %v670, %v663
    %v678 = vpack.c.bf16 %v671, %v664
    %v679 = vpack.c.bf16 %v672, %v665
    %v680 = vpack.c.bf16 %v673, %v666
    %v681 = vpack.c.bf16 %v674, %v667
    %v682 = vld [vmem:[%s3] sm:$0xff]
    %v683 = vld [vmem:[%s3 + $0x8] sm:$0xff]
    %v684 = vld [vmem:[%s3 + $0x10] sm:$0xff]
    %v685 = vld [vmem:[%s3 + $0x18] sm:$0xff]
    %v686 = vld [vmem:[%s3 + $0x20] sm:$0xff]
    %v687 = vld [vmem:[%s3 + $0x28] sm:$0xff]
    %v688 = vld [vmem:[%s3 + $0x30] sm:$0xff]
    %v689 = vld [vmem:[%s3 + $0x38] sm:$0xff]
    %v690 = vld [vmem:[%s3 + $0x40] sm:$0xff]
    %v691 = vld [vmem:[%s3 + $0x48] sm:$0xff]
    %v692 = vld [vmem:[%s3 + $0x50] sm:$0xff]
    %v693 = vld [vmem:[%s3 + $0x58] sm:$0xff]
    %v694 = vld [vmem:[%s3 + $0x60] sm:$0xff]
    %v695 = vld [vmem:[%s3 + $0x68] sm:$0xff]
    %v696 = vld [vmem:[%s3 + $0x70] sm:$0xff]
    %v697 = vld [vmem:[%s3 + $0x78] sm:$0xff]
    %v698 = vld [vmem:[%s3 + $0x80] sm:$0xff]
    %v699 = vld [vmem:[%s3 + $0x88] sm:$0xff]
    %v700 = vld [vmem:[%s3 + $0x90] sm:$0xff]
    %v701 = vld [vmem:[%s3 + $0x98] sm:$0xff]
    %v702 = vld [vmem:[%s3 + $0xa0] sm:$0xff]
    %v703 = vld [vmem:[%s3 + $0xa8] sm:$0xff]
    %v704 = vld [vmem:[%s3 + $0xb0] sm:$0xff]
    %v705 = vld [vmem:[%s3 + $0xb8] sm:$0xff]
    %v706 = vld [vmem:[%s3 + $0xc0] sm:$0xff]
    %v707 = vld [vmem:[%s3 + $0xc8] sm:$0xff]
    %v708 = vld [vmem:[%s3 + $0xd0] sm:$0xff]
    %v709 = vld [vmem:[%s3 + $0xd8] sm:$0xff]
    %v710 = vld [vmem:[%s3 + $0xe0] sm:$0xff]
    %v711 = vld [vmem:[%s3 + $0xe8] sm:$0xff]
    %v712 = vld [vmem:[%s3 + $0xf0] sm:$0xff]
    %v713 = vld [vmem:[%s3 + $0xf8] sm:$0xff]
    %v714 = vld [vmem:[%s3 + $0x100] sm:$0xff]
    %v715 = vld [vmem:[%s3 + $0x108] sm:$0xff]
    %v716 = vld [vmem:[%s3 + $0x110] sm:$0xff]
    %v717 = vld [vmem:[%s3 + $0x118] sm:$0xff]
    %v718 = vld [vmem:[%s3 + $0x120] sm:$0xff]
    %v719 = vld [vmem:[%s3 + $0x128] sm:$0xff]
    %v720 = vld [vmem:[%s3 + $0x130] sm:$0xff]
    %v721 = vld [vmem:[%s3 + $0x138] sm:$0xff]
    %v722 = vld [vmem:[%s3 + $0x140] sm:$0xff]
    %v723 = vld [vmem:[%s3 + $0x148] sm:$0xff]
    %v724 = vld [vmem:[%s3 + $0x150] sm:$0xff]
    %v725 = vld [vmem:[%s3 + $0x158] sm:$0xff]
    %v726 = vld [vmem:[%s3 + $0x160] sm:$0xff]
    %v727 = vld [vmem:[%s3 + $0x168] sm:$0xff]
    %v728 = vld [vmem:[%s3 + $0x170] sm:$0xff]
    %v729 = vld [vmem:[%s3 + $0x178] sm:$0xff]
    %v730 = vld [vmem:[%s3 + $0x180] sm:$0xff]
    %v731 = vld [vmem:[%s3 + $0x188] sm:$0xff]
    %v732 = vld [vmem:[%s3 + $0x190] sm:$0xff]
    %v733 = vld [vmem:[%s3 + $0x198] sm:$0xff]
    %v734 = vld [vmem:[%s3 + $0x1a0] sm:$0xff]
    %v735 = vld [vmem:[%s3 + $0x1a8] sm:$0xff]
    %v736 = vld [vmem:[%s3 + $0x1b0] sm:$0xff]
    %v737 = vld [vmem:[%s3 + $0x1b8] sm:$0xff]
    %v738 = vld [vmem:[%s3 + $0x1c0] sm:$0xff]
    %v739 = vld [vmem:[%s3 + $0x1c8] sm:$0xff]
    %v740 = vld [vmem:[%s3 + $0x1d0] sm:$0xff]
    %v741 = vld [vmem:[%s3 + $0x1d8] sm:$0xff]
    %v742 = vld [vmem:[%s3 + $0x1e0] sm:$0xff]
    %v743 = vld [vmem:[%s3 + $0x1e8] sm:$0xff]
    %v744 = vld [vmem:[%s3 + $0x1f0] sm:$0xff]
    %v745 = vld [vmem:[%s3 + $0x1f8] sm:$0xff]
    %v746 = vld [vmem:[%s3 + $0x200] sm:$0xff]
    %v747 = vld [vmem:[%s3 + $0x208] sm:$0xff]
    %v748 = vld [vmem:[%s3 + $0x210] sm:$0xff]
    %v749 = vld [vmem:[%s3 + $0x218] sm:$0xff]
    %v750 = vld [vmem:[%s3 + $0x220] sm:$0xff]
    %v751 = vld [vmem:[%s3 + $0x228] sm:$0xff]
    %v752 = vld [vmem:[%s3 + $0x230] sm:$0xff]
    %v753 = vld [vmem:[%s3 + $0x238] sm:$0xff]
    %v754 = vld [vmem:[%s3 + $0x240] sm:$0xff]
    %v755 = vld [vmem:[%s3 + $0x248] sm:$0xff]
    %v756 = vld [vmem:[%s3 + $0x250] sm:$0xff]
    %v757 = vld [vmem:[%s3 + $0x258] sm:$0xff]
    %v758 = vld [vmem:[%s3 + $0x260] sm:$0xff]
    %v759 = vld [vmem:[%s3 + $0x268] sm:$0xff]
    %v760 = vld [vmem:[%s3 + $0x270] sm:$0xff]
    %v761 = vld [vmem:[%s3 + $0x278] sm:$0xff]
    %v762 = vld [vmem:[%s3 + $0x280] sm:$0xff]
    %v763 = vld [vmem:[%s3 + $0x288] sm:$0xff]
    %v764 = vld [vmem:[%s3 + $0x290] sm:$0xff]
    %v765 = vld [vmem:[%s3 + $0x298] sm:$0xff]
    %v766 = vld [vmem:[%s3 + $0x2a0] sm:$0xff]
    %v767 = vld [vmem:[%s3 + $0x2a8] sm:$0xff]
    %v768 = vld [vmem:[%s3 + $0x2b0] sm:$0xff]
    %v769 = vld [vmem:[%s3 + $0x2b8] sm:$0xff]
    %v770 = vld [vmem:[%s3 + $0x2c0] sm:$0xff]
    %v771 = vld [vmem:[%s3 + $0x2c8] sm:$0xff]
    %v772 = vld [vmem:[%s3 + $0x2d0] sm:$0xff]
    %v773 = vld [vmem:[%s3 + $0x2d8] sm:$0xff]
    %v774 = vld [vmem:[%s3 + $0x2e0] sm:$0xff]
    %v775 = vld [vmem:[%s3 + $0x2e8] sm:$0xff]
    %v776 = vld [vmem:[%s3 + $0x2f0] sm:$0xff]
    %v777 = vld [vmem:[%s3 + $0x2f8] sm:$0xff]
    %v778 = vld [vmem:[%s3 + $0x300] sm:$0xff]
    %v779 = vld [vmem:[%s3 + $0x308] sm:$0xff]
    %v780 = vld [vmem:[%s3 + $0x310] sm:$0xff]
    %v781 = vld [vmem:[%s3 + $0x318] sm:$0xff]
    %v782 = vld [vmem:[%s3 + $0x320] sm:$0xff]
    %v783 = vld [vmem:[%s3 + $0x328] sm:$0xff]
    %v784 = vld [vmem:[%s3 + $0x330] sm:$0xff]
    %v785 = vld [vmem:[%s3 + $0x338] sm:$0xff]
    %v786 = vld [vmem:[%s4] sm:$0x3]
    %v788 = vperm.slane %v786, 0
    %v789 = vperm.slane %v786, 1
    %v896 = vunpack.c.l.b16 %v682
    %v897 = vunpack.c.h.b16 %v682
    %v898 = vunpack.c.l.b16 %v683
    %v899 = vunpack.c.h.b16 %v683
    %v900 = vunpack.c.l.b16 %v684
    %v901 = vunpack.c.h.b16 %v684
    %v902 = vunpack.c.l.b16 %v685
    %v903 = vunpack.c.h.b16 %v685
    %v904 = vunpack.c.l.b16 %v686
    %v905 = vunpack.c.h.b16 %v686
    %v906 = vunpack.c.l.b16 %v687
    %v907 = vunpack.c.h.b16 %v687
    %v908 = vunpack.c.l.b16 %v688
    %v909 = vunpack.c.h.b16 %v688
    %v910 = vunpack.c.l.b16 %v689
    %v911 = vunpack.c.h.b16 %v689
    %v912 = vunpack.c.l.b16 %v690
    %v913 = vunpack.c.h.b16 %v690
    %v914 = vunpack.c.l.b16 %v691
    %v915 = vunpack.c.h.b16 %v691
    %v916 = vunpack.c.l.b16 %v692
    %v917 = vunpack.c.h.b16 %v692
    %v918 = vunpack.c.l.b16 %v693
    %v919 = vunpack.c.h.b16 %v693
    %v920 = vunpack.c.l.b16 %v694
    %v921 = vunpack.c.h.b16 %v694
    %v922 = vunpack.c.l.b16 %v695
    %v923 = vunpack.c.h.b16 %v695
    %v924 = vunpack.c.l.b16 %v696
    %v925 = vunpack.c.h.b16 %v696
    %v926 = vunpack.c.l.b16 %v697
    %v927 = vunpack.c.h.b16 %v697
    %v928 = vunpack.c.l.b16 %v698
    %v929 = vunpack.c.h.b16 %v698
    %v930 = vunpack.c.l.b16 %v699
    %v931 = vunpack.c.h.b16 %v699
    %v932 = vunpack.c.l.b16 %v700
    %v933 = vunpack.c.h.b16 %v700
    %v934 = vunpack.c.l.b16 %v701
    %v935 = vunpack.c.h.b16 %v701
    %v936 = vunpack.c.l.b16 %v702
    %v937 = vunpack.c.h.b16 %v702
    %v938 = vunpack.c.l.b16 %v703
    %v939 = vunpack.c.h.b16 %v703
    %v940 = vunpack.c.l.b16 %v704
    %v941 = vunpack.c.h.b16 %v704
    %v942 = vunpack.c.l.b16 %v705
    %v943 = vunpack.c.h.b16 %v705
    %v944 = vunpack.c.l.b16 %v706
    %v945 = vunpack.c.h.b16 %v706
    %v946 = vunpack.c.l.b16 %v707
    %v947 = vunpack.c.h.b16 %v707
    %v948 = vunpack.c.l.b16 %v708
    %v949 = vunpack.c.h.b16 %v708
    %v950 = vunpack.c.l.b16 %v709
    %v951 = vunpack.c.h.b16 %v709
    %v952 = vunpack.c.l.b16 %v710
    %v953 = vunpack.c.h.b16 %v710
    %v954 = vunpack.c.l.b16 %v711
    %v955 = vunpack.c.h.b16 %v711
    %v956 = vunpack.c.l.b16 %v712
    %v957 = vunpack.c.h.b16 %v712
    %v958 = vunpack.c.l.b16 %v713
    %v959 = vunpack.c.h.b16 %v713
    %v960 = vunpack.c.l.b16 %v714
    %v961 = vunpack.c.h.b16 %v714
    %v962 = vunpack.c.l.b16 %v715
    %v963 = vunpack.c.h.b16 %v715
    %v964 = vunpack.c.l.b16 %v716
    %v965 = vunpack.c.h.b16 %v716
    %v966 = vunpack.c.l.b16 %v717
    %v967 = vunpack.c.h.b16 %v717
    %v968 = vunpack.c.l.b16 %v718
    %v969 = vunpack.c.h.b16 %v718
    %v970 = vunpack.c.l.b16 %v719
    %v971 = vunpack.c.h.b16 %v719
    %v972 = vunpack.c.l.b16 %v720
    %v973 = vunpack.c.h.b16 %v720
    %v974 = vunpack.c.l.b16 %v721
    %v975 = vunpack.c.h.b16 %v721
    %v976 = vunpack.c.l.b16 %v722
    %v977 = vunpack.c.h.b16 %v722
    %v978 = vunpack.c.l.b16 %v723
    %v979 = vunpack.c.h.b16 %v723
    %v980 = vunpack.c.l.b16 %v724
    %v981 = vunpack.c.h.b16 %v724
    %v982 = vunpack.c.l.b16 %v725
    %v983 = vunpack.c.h.b16 %v725
    %v984 = vunpack.c.l.b16 %v726
    %v985 = vunpack.c.h.b16 %v726
    %v986 = vunpack.c.l.b16 %v727
    %v987 = vunpack.c.h.b16 %v727
    %v988 = vunpack.c.l.b16 %v728
    %v989 = vunpack.c.h.b16 %v728
    %v990 = vunpack.c.l.b16 %v729
    %v991 = vunpack.c.h.b16 %v729
    %v992 = vunpack.c.l.b16 %v730
    %v993 = vunpack.c.h.b16 %v730
    %v994 = vunpack.c.l.b16 %v731
    %v995 = vunpack.c.h.b16 %v731
    %v996 = vunpack.c.l.b16 %v732
    %v997 = vunpack.c.h.b16 %v732
    %v998 = vunpack.c.l.b16 %v733
    %v999 = vunpack.c.h.b16 %v733
    %v1000 = vunpack.c.l.b16 %v734
    %v1001 = vunpack.c.h.b16 %v734
    %v1002 = vunpack.c.l.b16 %v735
    %v1003 = vunpack.c.h.b16 %v735
    %v1004 = vunpack.c.l.b16 %v736
    %v1005 = vunpack.c.h.b16 %v736
    %v1006 = vunpack.c.l.b16 %v737
    %v1007 = vunpack.c.h.b16 %v737
    %v1008 = vunpack.c.l.b16 %v738
    %v1009 = vunpack.c.h.b16 %v738
    %v1010 = vunpack.c.l.b16 %v739
    %v1011 = vunpack.c.h.b16 %v739
    %v1012 = vunpack.c.l.b16 %v740
    %v1013 = vunpack.c.h.b16 %v740
    %v1014 = vunpack.c.l.b16 %v741
    %v1015 = vunpack.c.h.b16 %v741
    %v1016 = vunpack.c.l.b16 %v742
    %v1017 = vunpack.c.h.b16 %v742
    %v1018 = vunpack.c.l.b16 %v743
    %v1019 = vunpack.c.h.b16 %v743
    %v1020 = vunpack.c.l.b16 %v744
    %v1021 = vunpack.c.h.b16 %v744
    %v1022 = vunpack.c.l.b16 %v745
    %v1023 = vunpack.c.h.b16 %v745
    %v1024 = vunpack.c.l.b16 %v746
    %v1025 = vunpack.c.h.b16 %v746
    %v1026 = vunpack.c.l.b16 %v747
    %v1027 = vunpack.c.h.b16 %v747
    %v1028 = vunpack.c.l.b16 %v748
    %v1029 = vunpack.c.h.b16 %v748
    %v1030 = vunpack.c.l.b16 %v749
    %v1031 = vunpack.c.h.b16 %v749
    %v1032 = vunpack.c.l.b16 %v750
    %v1033 = vunpack.c.h.b16 %v750
    %v1034 = vunpack.c.l.b16 %v751
    %v1035 = vunpack.c.h.b16 %v751
    %v1036 = vunpack.c.l.b16 %v752
    %v1037 = vunpack.c.h.b16 %v752
    %v1038 = vunpack.c.l.b16 %v753
    %v1039 = vunpack.c.h.b16 %v753
    %v1040 = vunpack.c.l.b16 %v754
    %v1041 = vunpack.c.h.b16 %v754
    %v1042 = vunpack.c.l.b16 %v755
    %v1043 = vunpack.c.h.b16 %v755
    %v1044 = vunpack.c.l.b16 %v756
    %v1045 = vunpack.c.h.b16 %v756
    %v1046 = vunpack.c.l.b16 %v757
    %v1047 = vunpack.c.h.b16 %v757
    %v1048 = vunpack.c.l.b16 %v758
    %v1049 = vunpack.c.h.b16 %v758
    %v1050 = vunpack.c.l.b16 %v759
    %v1051 = vunpack.c.h.b16 %v759
    %v1052 = vunpack.c.l.b16 %v760
    %v1053 = vunpack.c.h.b16 %v760
    %v1054 = vunpack.c.l.b16 %v761
    %v1055 = vunpack.c.h.b16 %v761
    %v1056 = vunpack.c.l.b16 %v762
    %v1057 = vunpack.c.h.b16 %v762
    %v1058 = vunpack.c.l.b16 %v763
    %v1059 = vunpack.c.h.b16 %v763
    %v1060 = vunpack.c.l.b16 %v764
    %v1061 = vunpack.c.h.b16 %v764
    %v1062 = vunpack.c.l.b16 %v765
    %v1063 = vunpack.c.h.b16 %v765
    %v1064 = vunpack.c.l.b16 %v766
    %v1065 = vunpack.c.h.b16 %v766
    %v1066 = vunpack.c.l.b16 %v767
    %v1067 = vunpack.c.h.b16 %v767
    %v1068 = vunpack.c.l.b16 %v768
    %v1069 = vunpack.c.h.b16 %v768
    %v1070 = vunpack.c.l.b16 %v769
    %v1071 = vunpack.c.h.b16 %v769
    %v1072 = vunpack.c.l.b16 %v770
    %v1073 = vunpack.c.h.b16 %v770
    %v1074 = vunpack.c.l.b16 %v771
    %v1075 = vunpack.c.h.b16 %v771
    %v1076 = vunpack.c.l.b16 %v772
    %v1077 = vunpack.c.h.b16 %v772
    %v1078 = vunpack.c.l.b16 %v773
    %v1079 = vunpack.c.h.b16 %v773
    %v1080 = vunpack.c.l.b16 %v774
    %v1081 = vunpack.c.h.b16 %v774
    %v1082 = vunpack.c.l.b16 %v775
    %v1083 = vunpack.c.h.b16 %v775
    %v1084 = vunpack.c.l.b16 %v776
    %v1085 = vunpack.c.h.b16 %v776
    %v1086 = vunpack.c.l.b16 %v777
    %v1087 = vunpack.c.h.b16 %v777
    %v1088 = vunpack.c.l.b16 %v778
    %v1089 = vunpack.c.h.b16 %v778
    %v1090 = vunpack.c.l.b16 %v779
    %v1091 = vunpack.c.h.b16 %v779
    %v1092 = vunpack.c.l.b16 %v780
    %v1093 = vunpack.c.h.b16 %v780
    %v1094 = vunpack.c.l.b16 %v781
    %v1095 = vunpack.c.h.b16 %v781
    %v1096 = vunpack.c.l.b16 %v782
    %v1097 = vunpack.c.h.b16 %v782
    %v1098 = vunpack.c.l.b16 %v783
    %v1099 = vunpack.c.h.b16 %v783
    %v1100 = vunpack.c.l.b16 %v784
    %v1101 = vunpack.c.h.b16 %v784
    %v1102 = vunpack.c.l.b16 %v785
    %v1103 = vunpack.c.h.b16 %v785
    %v1104 = vpack.c.b16 %v898, %v896
    %v1105 = vpack.c.b16 %v899, %v897
    %v1106 = vpack.c.b16 %v902, %v900
    %v1107 = vpack.c.b16 %v903, %v901
    %v1108 = vpack.c.b16 %v906, %v904
    %v1109 = vpack.c.b16 %v907, %v905
    %v1110 = vpack.c.b16 %v910, %v908
    %v1111 = vpack.c.b16 %v911, %v909
    %v1112 = vpack.c.b16 %v914, %v912
    %v1113 = vpack.c.b16 %v915, %v913
    %v1114 = vpack.c.b16 %v918, %v916
    %v1115 = vpack.c.b16 %v919, %v917
    %v1116 = vpack.c.b16 %v922, %v920
    %v1117 = vpack.c.b16 %v923, %v921
    %v1118 = vpack.c.b16 %v926, %v924
    %v1119 = vpack.c.b16 %v927, %v925
    %v1120 = vpack.c.b16 %v930, %v928
    %v1121 = vpack.c.b16 %v931, %v929
    %v1122 = vpack.c.b16 %v934, %v932
    %v1123 = vpack.c.b16 %v935, %v933
    %v1124 = vpack.c.b16 %v938, %v936
    %v1125 = vpack.c.b16 %v939, %v937
    %v1126 = vpack.c.b16 %v942, %v940
    %v1127 = vpack.c.b16 %v943, %v941
    %v1128 = vpack.c.b16 %v946, %v944
    %v1129 = vpack.c.b16 %v947, %v945
    %v1130 = vpack.c.b16 %v950, %v948
    %v1131 = vpack.c.b16 %v951, %v949
    %v1132 = vpack.c.b16 %v954, %v952
    %v1133 = vpack.c.b16 %v955, %v953
    %v1134 = vpack.c.b16 %v958, %v956
    %v1135 = vpack.c.b16 %v959, %v957
    %v1136 = vpack.c.b16 %v962, %v960
    %v1137 = vpack.c.b16 %v963, %v961
    %v1138 = vpack.c.b16 %v966, %v964
    %v1139 = vpack.c.b16 %v967, %v965
    %v1140 = vpack.c.b16 %v970, %v968
    %v1141 = vpack.c.b16 %v971, %v969
    %v1142 = vpack.c.b16 %v974, %v972
    %v1143 = vpack.c.b16 %v975, %v973
    %v1144 = vpack.c.b16 %v978, %v976
    %v1145 = vpack.c.b16 %v979, %v977
    %v1146 = vpack.c.b16 %v982, %v980
    %v1147 = vpack.c.b16 %v983, %v981
    %v1148 = vpack.c.b16 %v986, %v984
    %v1149 = vpack.c.b16 %v987, %v985
    %v1150 = vpack.c.b16 %v990, %v988
    %v1151 = vpack.c.b16 %v991, %v989
    %v1152 = vpack.c.b16 %v994, %v992
    %v1153 = vpack.c.b16 %v995, %v993
    %v1154 = vpack.c.b16 %v998, %v996
    %v1155 = vpack.c.b16 %v999, %v997
    %v1156 = vpack.c.b16 %v1002, %v1000
    %v1157 = vpack.c.b16 %v1003, %v1001
    %v1158 = vpack.c.b16 %v1006, %v1004
    %v1159 = vpack.c.b16 %v1007, %v1005
    %v1160 = vpack.c.b16 %v1010, %v1008
    %v1161 = vpack.c.b16 %v1011, %v1009
    %v1162 = vpack.c.b16 %v1014, %v1012
    %v1163 = vpack.c.b16 %v1015, %v1013
    %v1164 = vpack.c.b16 %v1018, %v1016
    %v1165 = vpack.c.b16 %v1019, %v1017
    %v1166 = vpack.c.b16 %v1022, %v1020
    %v1167 = vpack.c.b16 %v1023, %v1021
    %v1168 = vpack.c.b16 %v1026, %v1024
    %v1169 = vpack.c.b16 %v1027, %v1025
    %v1170 = vpack.c.b16 %v1030, %v1028
    %v1171 = vpack.c.b16 %v1031, %v1029
    %v1172 = vpack.c.b16 %v1034, %v1032
    %v1173 = vpack.c.b16 %v1035, %v1033
    %v1174 = vpack.c.b16 %v1038, %v1036
    %v1175 = vpack.c.b16 %v1039, %v1037
    %v1176 = vpack.c.b16 %v1042, %v1040
    %v1177 = vpack.c.b16 %v1043, %v1041
    %v1178 = vpack.c.b16 %v1046, %v1044
    %v1179 = vpack.c.b16 %v1047, %v1045
    %v1180 = vpack.c.b16 %v1050, %v1048
    %v1181 = vpack.c.b16 %v1051, %v1049
    %v1182 = vpack.c.b16 %v1054, %v1052
    %v1183 = vpack.c.b16 %v1055, %v1053
    %v1184 = vpack.c.b16 %v1058, %v1056
    %v1185 = vpack.c.b16 %v1059, %v1057
    %v1186 = vpack.c.b16 %v1062, %v1060
    %v1187 = vpack.c.b16 %v1063, %v1061
    %v1188 = vpack.c.b16 %v1066, %v1064
    %v1189 = vpack.c.b16 %v1067, %v1065
    %v1190 = vpack.c.b16 %v1070, %v1068
    %v1191 = vpack.c.b16 %v1071, %v1069
    %v1192 = vpack.c.b16 %v1074, %v1072
    %v1193 = vpack.c.b16 %v1075, %v1073
    %v1194 = vpack.c.b16 %v1078, %v1076
    %v1195 = vpack.c.b16 %v1079, %v1077
    %v1196 = vpack.c.b16 %v1082, %v1080
    %v1197 = vpack.c.b16 %v1083, %v1081
    %v1198 = vpack.c.b16 %v1086, %v1084
    %v1199 = vpack.c.b16 %v1087, %v1085
    %v1200 = vpack.c.b16 %v1090, %v1088
    %v1201 = vpack.c.b16 %v1091, %v1089
    %v1202 = vpack.c.b16 %v1094, %v1092
    %v1203 = vpack.c.b16 %v1095, %v1093
    %v1204 = vpack.c.b16 %v1098, %v1096
    %v1205 = vpack.c.b16 %v1099, %v1097
    %v1206 = vpack.c.b16 %v1102, %v1100
    %v1207 = vpack.c.b16 %v1103, %v1101
    %vm1312 = vcmask 523264
    %v1314 = vsel %vm1312, %v681, 0
    %1316 = vmatpush.bf16.msra.mxu0 %v1118
    %1317 = vmatpush.bf16.msra.mxu0 %v1116
    %1318 = vmatpush.bf16.msra.mxu0 %v1114
    %1319 = vmatpush.bf16.msra.mxu0 %v1112
    %1320 = vmatpush.bf16.msra.mxu0 %v1110
    %1321 = vmatpush.bf16.msra.mxu0 %v1108
    %1322 = vmatpush.bf16.msra.mxu0 %v1106
    %1323 = vmatpush.bf16.msra.mxu0 %v1104
    %1324 = vmatmul.bf16.gmra.mxu0 %v675
    %v1325 = vpop.f32.mrf.mxu0
    %v1326 = vadd.f32 %v788, %v1325
    %v1327 = vpop.f32.mrf.mxu0
    %v1328 = vadd.f32 %v788, %v1327
    %1329 = vdwg.mxu0
    %1330 = vmatpush.bf16.msra.mxu0 %v1134
    %1331 = vmatpush.bf16.msra.mxu0 %v1132
    %1332 = vmatpush.bf16.msra.mxu0 %v1130
    %1333 = vmatpush.bf16.msra.mxu0 %v1128
    %1334 = vmatpush.bf16.msra.mxu0 %v1126
    %1335 = vmatpush.bf16.msra.mxu0 %v1124
    %1336 = vmatpush.bf16.msra.mxu0 %v1122
    %1337 = vmatpush.bf16.msra.mxu0 %v1120
    %1338 = vmatmul.bf16.gmra.mxu0 %v676
    %v1339 = vpop.f32.mrf.mxu0
    %v1340 = vadd.f32 %v1326, %v1339
    %v1341 = vpop.f32.mrf.mxu0
    %v1342 = vadd.f32 %v1328, %v1341
    %1343 = vdwg.mxu0
    %1344 = vmatpush.bf16.msra.mxu0 %v1150
    %1345 = vmatpush.bf16.msra.mxu0 %v1148
    %1346 = vmatpush.bf16.msra.mxu0 %v1146
    %1347 = vmatpush.bf16.msra.mxu0 %v1144
    %1348 = vmatpush.bf16.msra.mxu0 %v1142
    %1349 = vmatpush.bf16.msra.mxu0 %v1140
    %1350 = vmatpush.bf16.msra.mxu0 %v1138
    %1351 = vmatpush.bf16.msra.mxu0 %v1136
    %1352 = vmatmul.bf16.gmra.mxu0 %v677
    %v1353 = vpop.f32.mrf.mxu0
    %v1354 = vadd.f32 %v1340, %v1353
    %v1355 = vpop.f32.mrf.mxu0
    %v1356 = vadd.f32 %v1342, %v1355
    %1357 = vdwg.mxu0
    %1358 = vmatpush.bf16.msra.mxu0 %v1166
    %1359 = vmatpush.bf16.msra.mxu0 %v1164
    %1360 = vmatpush.bf16.msra.mxu0 %v1162
    %1361 = vmatpush.bf16.msra.mxu0 %v1160
    %1362 = vmatpush.bf16.msra.mxu0 %v1158
    %1363 = vmatpush.bf16.msra.mxu0 %v1156
    %1364 = vmatpush.bf16.msra.mxu0 %v1154
    %1365 = vmatpush.bf16.msra.mxu0 %v1152
    %1366 = vmatmul.bf16.gmra.mxu0 %v678
    %v1367 = vpop.f32.mrf.mxu0
    %v1368 = vadd.f32 %v1354, %v1367
    %v1369 = vpop.f32.mrf.mxu0
    %v1370 = vadd.f32 %v1356, %v1369
    %1371 = vdwg.mxu0
    %1372 = vmatpush.bf16.msra.mxu0 %v1182
    %1373 = vmatpush.bf16.msra.mxu0 %v1180
    %1374 = vmatpush.bf16.msra.mxu0 %v1178
    %1375 = vmatpush.bf16.msra.mxu0 %v1176
    %1376 = vmatpush.bf16.msra.mxu0 %v1174
    %1377 = vmatpush.bf16.msra.mxu0 %v1172
    %1378 = vmatpush.bf16.msra.mxu0 %v1170
    %1379 = vmatpush.bf16.msra.mxu0 %v1168
    %1380 = vmatmul.bf16.gmra.mxu0 %v679
    %v1381 = vpop.f32.mrf.mxu0
    %v1382 = vadd.f32 %v1368, %v1381
    %v1383 = vpop.f32.mrf.mxu0
    %v1384 = vadd.f32 %v1370, %v1383
    %1385 = vdwg.mxu0
    %1386 = vmatpush.bf16.msra.mxu0 %v1198
    %1387 = vmatpush.bf16.msra.mxu0 %v1196
    %1388 = vmatpush.bf16.msra.mxu0 %v1194
    %1389 = vmatpush.bf16.msra.mxu0 %v1192
    %1390 = vmatpush.bf16.msra.mxu0 %v1190
    %1391 = vmatpush.bf16.msra.mxu0 %v1188
    %1392 = vmatpush.bf16.msra.mxu0 %v1186
    %1393 = vmatpush.bf16.msra.mxu0 %v1184
    %1394 = vmatmul.bf16.gmra.mxu0 %v680
    %v1395 = vpop.f32.mrf.mxu0
    %v1396 = vadd.f32 %v1382, %v1395
    %v1397 = vpop.f32.mrf.mxu0
    %v1398 = vadd.f32 %v1384, %v1397
    %1399 = vdwg.mxu0
    %1400 = vmatpush.bf16.msra.mxu0 0
    %1401 = vmatpush.bf16.msra.mxu0 0
    %1402 = vmatpush.bf16.msra.mxu0 0
    %1403 = vmatpush.bf16.msra.mxu0 0
    %1404 = vmatpush.bf16.msra.mxu0 %v1206
    %1405 = vmatpush.bf16.msra.mxu0 %v1204
    %1406 = vmatpush.bf16.msra.mxu0 %v1202
    %1407 = vmatpush.bf16.msra.mxu0 %v1200
    %1408 = vmatmul.bf16.gmra.mxu0 %v1314
    %v1409 = vpop.f32.mrf.mxu0
    %v1410 = vadd.f32 %v1396, %v1409
    %v1411 = vpop.f32.mrf.mxu0
    %v1412 = vadd.f32 %v1398, %v1411
    %1413 = vdwg.mxu0
    %1414 = vmatpush.bf16.msra.mxu0 %v1119
    %1415 = vmatpush.bf16.msra.mxu0 %v1117
    %1416 = vmatpush.bf16.msra.mxu0 %v1115
    %1417 = vmatpush.bf16.msra.mxu0 %v1113
    %1418 = vmatpush.bf16.msra.mxu0 %v1111
    %1419 = vmatpush.bf16.msra.mxu0 %v1109
    %1420 = vmatpush.bf16.msra.mxu0 %v1107
    %1421 = vmatpush.bf16.msra.mxu0 %v1105
    %1422 = vmatmul.bf16.gmra.mxu0 %v675
    %v1423 = vpop.f32.mrf.mxu0
    %v1424 = vadd.f32 %v789, %v1423
    %v1425 = vpop.f32.mrf.mxu0
    %v1426 = vadd.f32 %v789, %v1425
    %1427 = vdwg.mxu0
    %1428 = vmatpush.bf16.msra.mxu0 %v1135
    %1429 = vmatpush.bf16.msra.mxu0 %v1133
    %1430 = vmatpush.bf16.msra.mxu0 %v1131
    %1431 = vmatpush.bf16.msra.mxu0 %v1129
    %1432 = vmatpush.bf16.msra.mxu0 %v1127
    %1433 = vmatpush.bf16.msra.mxu0 %v1125
    %1434 = vmatpush.bf16.msra.mxu0 %v1123
    %1435 = vmatpush.bf16.msra.mxu0 %v1121
    %1436 = vmatmul.bf16.gmra.mxu0 %v676
    %v1437 = vpop.f32.mrf.mxu0
    %v1438 = vadd.f32 %v1424, %v1437
    %v1439 = vpop.f32.mrf.mxu0
    %v1440 = vadd.f32 %v1426, %v1439
    %1441 = vdwg.mxu0
    %1442 = vmatpush.bf16.msra.mxu0 %v1151
    %1443 = vmatpush.bf16.msra.mxu0 %v1149
    %1444 = vmatpush.bf16.msra.mxu0 %v1147
    %1445 = vmatpush.bf16.msra.mxu0 %v1145
    %1446 = vmatpush.bf16.msra.mxu0 %v1143
    %1447 = vmatpush.bf16.msra.mxu0 %v1141
    %1448 = vmatpush.bf16.msra.mxu0 %v1139
    %1449 = vmatpush.bf16.msra.mxu0 %v1137
    %1450 = vmatmul.bf16.gmra.mxu0 %v677
    %v1451 = vpop.f32.mrf.mxu0
    %v1452 = vadd.f32 %v1438, %v1451
    %v1453 = vpop.f32.mrf.mxu0
    %v1454 = vadd.f32 %v1440, %v1453
    %1455 = vdwg.mxu0
    %1456 = vmatpush.bf16.msra.mxu0 %v1167
    %1457 = vmatpush.bf16.msra.mxu0 %v1165
    %1458 = vmatpush.bf16.msra.mxu0 %v1163
    %1459 = vmatpush.bf16.msra.mxu0 %v1161
    %1460 = vmatpush.bf16.msra.mxu0 %v1159
    %1461 = vmatpush.bf16.msra.mxu0 %v1157
    %1462 = vmatpush.bf16.msra.mxu0 %v1155
    %1463 = vmatpush.bf16.msra.mxu0 %v1153
    %1464 = vmatmul.bf16.gmra.mxu0 %v678
    %v1465 = vpop.f32.mrf.mxu0
    %v1466 = vadd.f32 %v1452, %v1465
    %v1467 = vpop.f32.mrf.mxu0
    %v1468 = vadd.f32 %v1454, %v1467
    %1469 = vdwg.mxu0
    %1470 = vmatpush.bf16.msra.mxu0 %v1183
    %1471 = vmatpush.bf16.msra.mxu0 %v1181
    %1472 = vmatpush.bf16.msra.mxu0 %v1179
    %1473 = vmatpush.bf16.msra.mxu0 %v1177
    %1474 = vmatpush.bf16.msra.mxu0 %v1175
    %1475 = vmatpush.bf16.msra.mxu0 %v1173
    %1476 = vmatpush.bf16.msra.mxu0 %v1171
    %1477 = vmatpush.bf16.msra.mxu0 %v1169
    %1478 = vmatmul.bf16.gmra.mxu0 %v679
    %v1479 = vpop.f32.mrf.mxu0
    %v1480 = vadd.f32 %v1466, %v1479
    %v1481 = vpop.f32.mrf.mxu0
    %v1482 = vadd.f32 %v1468, %v1481
    %1483 = vdwg.mxu0
    %1484 = vmatpush.bf16.msra.mxu0 %v1199
    %1485 = vmatpush.bf16.msra.mxu0 %v1197
    %1486 = vmatpush.bf16.msra.mxu0 %v1195
    %1487 = vmatpush.bf16.msra.mxu0 %v1193
    %1488 = vmatpush.bf16.msra.mxu0 %v1191
    %1489 = vmatpush.bf16.msra.mxu0 %v1189
    %1490 = vmatpush.bf16.msra.mxu0 %v1187
    %1491 = vmatpush.bf16.msra.mxu0 %v1185
    %1492 = vmatmul.bf16.gmra.mxu0 %v680
    %v1493 = vpop.f32.mrf.mxu0
    %v1494 = vadd.f32 %v1480, %v1493
    %v1495 = vpop.f32.mrf.mxu0
    %v1496 = vadd.f32 %v1482, %v1495
    %1497 = vdwg.mxu0
    %1498 = vmatpush.bf16.msra.mxu0 0
    %1499 = vmatpush.bf16.msra.mxu0 0
    %1500 = vmatpush.bf16.msra.mxu0 0
    %1501 = vmatpush.bf16.msra.mxu0 0
    %1502 = vmatpush.bf16.msra.mxu0 %v1207
    %1503 = vmatpush.bf16.msra.mxu0 %v1205
    %1504 = vmatpush.bf16.msra.mxu0 %v1203
    %1505 = vmatpush.bf16.msra.mxu0 %v1201
    %1506 = vmatmul.bf16.gmra.mxu0 %v1314
    %v1507 = vpop.f32.mrf.mxu0
    %v1508 = vadd.f32 %v1494, %v1507
    %v1509 = vpop.f32.mrf.mxu0
    %v1510 = vadd.f32 %v1496, %v1509
    %1511 = vdwg.mxu0
    %v1512 = vmax.f32 %v1410, 0.0
    %v1513 = vmax.f32 %v1508, 0.0
    %v1514 = vmax.f32 %v1412, 0.0
    %v1515 = vmax.f32 %v1510, 0.0
    %1520 = vrot.lane.b32.xlu0 %v1512, 96
    %v1521 = vpop.permute.xlu0 %1520
    %1522 = vrot.lane.b32.xlu0 %v1513, 96
    %v1523 = vpop.permute.xlu0 %1522
    %1524 = vrot.lane.b32.xlu0 %v1514, 96
    %v1525 = vpop.permute.xlu0 %1524
    %1526 = vrot.lane.b32.xlu0 %v1515, 96
    %v1527 = vpop.permute.xlu0 %1526
    %vm1528 = vcmask 785408
    %v1529 = vsel %vm1528, %v1521, %v1523
    %v1530 = vsel %vm1528, %v1525, %v1527
    %v1533 = vmax.f32 %v1512, %v1529
    %v1534 = vmax.f32 %v1514, %v1530
    %v1536 = vrot.slane %v1533, 1
    %v1538 = vmax.f32 %v1533, %v1536
    %1539 = vst [vmem:[#allocation3] sm:$0x1] %v1538
    %v1541 = vrot.slane %v1538, 7
    %v1542 = vrot.slane %v1541, 2
    %1544 = vst [vmem:[#allocation3 + $0x2] sm:$0x1] %v1542
    %1545 = vst.sshfl [vmem:[#allocation1] sm:$0xff pattern:$0x73625140] %v1538
    %s1546 = scalar_lea.vmem [#allocation1], 1
    %v1547 = vld [vmem:[%s1546] ss:$4 sm:$0xff]
    %1549 = vst [vmem:[#allocation3 + $0x4] sm:$0x1] %v1547
    %1550 = vst.sshfl [vmem:[#allocation1] sm:$0xff pattern:$0x73625140] %v1538
    %s1551 = scalar_lea.vmem [#allocation1], 1
    %v1552 = vld [vmem:[%s1551] ss:$4 sm:$0xff]
    %v1553 = vrot.slane %v1552, 7
    %v1554 = vrot.slane %v1553, 2
    %1556 = vst [vmem:[#allocation3 + $0x6] sm:$0x1] %v1554
    %v1558 = vrot.slane %v1534, 1
    %v1559 = vsel %vm628, %v1536, %v1558
    %v1562 = vmax.f32 %v1533, %v1559
    %v1563 = vmax.f32 %v1534, %v1558
    %1565 = vst.sshfl [vmem:[#allocation1] sm:$0xff pattern:$0x73625140] %v1562
    %s1566 = scalar_lea.vmem [#allocation1], 2
    %v1567 = vld [vmem:[%s1566] ss:$4 sm:$0xff]
    %v1568 = vrot.slane %v1567, 7
    %v1569 = vrot.slane %v1568, 2
    %1571 = vst [vmem:[#allocation3 + $0x1] sm:$0x1] %v1569
    %1572 = vst.sshfl [vmem:[#allocation1] sm:$0xff pattern:$0x73625140] %v1562
    %s1573 = scalar_lea.vmem [#allocation1], 3
    %v1574 = vld [vmem:[%s1573] ss:$4 sm:$0xff]
    %1576 = vst [vmem:[#allocation3 + $0x3] sm:$0x1] %v1574
    %1577 = vst.sshfl [vmem:[#allocation1] sm:$0xff pattern:$0x73625140] %v1562
    %s1578 = scalar_lea.vmem [#allocation1], 3
    %v1579 = vld [vmem:[%s1578] ss:$4 sm:$0xff]
    %v1580 = vrot.slane %v1579, 7
    %v1581 = vrot.slane %v1580, 2
    %1583 = vst [vmem:[#allocation3 + $0x5] sm:$0x1] %v1581
    %1584 = vst [vmem:[#allocation3 + $0x7] sm:$0x1] %v1563
    %v1585 = vld [vmem:[#allocation3] sm:$0xff]
    %1587 = vst [vmem:[#allocation1] ss:$4 sm:$0xff] %v1585
    %v1588 = vld.sshfl [vmem:[#allocation1] sm:$0xff pattern:$0x73625140]
    %v1589 = vld.sshfl [vmem:[#allocation1 + $0x8] sm:$0xff pattern:$0x73625140]
    %v1590 = vld.sshfl [vmem:[#allocation1 + $0x10] sm:$0xff pattern:$0x73625140]
    %v1591 = vld.sshfl [vmem:[#allocation1 + $0x18] sm:$0xff pattern:$0x73625140]
    %v1596 = vpack.c.bf16 %v1588, %v1588
    %v1597 = vpack.c.bf16 %v1589, %v1589
    %v1598 = vpack.c.bf16 %v1590, %v1590
    %v1599 = vpack.c.bf16 %v1591, %v1591
    %v1600 = vld [vmem:[%s5] sm:$0xf]
    %v1601 = vld [vmem:[%s5 + $0x4] sm:$0xf]
    %v1602 = vld [vmem:[%s5 + $0x8] sm:$0xf]
    %v1603 = vld [vmem:[%s5 + $0xc] sm:$0xf]
    %v1604 = vld [vmem:[%s5 + $0x10] sm:$0xf]
    %v1605 = vld [vmem:[%s5 + $0x14] sm:$0xf]
    %v1606 = vld [vmem:[%s5 + $0x18] sm:$0xf]
    %v1607 = vld [vmem:[%s5 + $0x1c] sm:$0xf]
    %v1608 = vld [vmem:[%s5 + $0x20] sm:$0xf]
    %v1609 = vld [vmem:[%s5 + $0x24] sm:$0xf]
    %v1610 = vld [vmem:[%s5 + $0x28] sm:$0xf]
    %v1611 = vld [vmem:[%s5 + $0x2c] sm:$0xf]
    %v1612 = vld [vmem:[%s5 + $0x30] sm:$0xf]
    %v1613 = vld [vmem:[%s5 + $0x34] sm:$0xf]
    %v1614 = vld [vmem:[%s5 + $0x38] sm:$0xf]
    %v1615 = vld [vmem:[%s5 + $0x3c] sm:$0xf]
    %v1616 = vld [vmem:[%s5 + $0x40] sm:$0xf]
    %v1617 = vld [vmem:[%s5 + $0x44] sm:$0xf]
    %v1618 = vld [vmem:[%s5 + $0x48] sm:$0xf]
    %v1619 = vld [vmem:[%s5 + $0x4c] sm:$0xf]
    %v1620 = vld [vmem:[%s5 + $0x50] sm:$0xf]
    %v1621 = vld [vmem:[%s5 + $0x54] sm:$0xf]
    %v1622 = vld [vmem:[%s5 + $0x58] sm:$0xf]
    %v1623 = vld [vmem:[%s5 + $0x5c] sm:$0xf]
    %v1624 = vld [vmem:[%s5 + $0x60] sm:$0xf]
    %v1625 = vld [vmem:[%s5 + $0x64] sm:$0xf]
    %v1626 = vld [vmem:[%s5 + $0x68] sm:$0xf]
    %v1627 = vld [vmem:[%s5 + $0x6c] sm:$0xf]
    %v1628 = vld [vmem:[%s5 + $0x70] sm:$0xf]
    %v1629 = vld [vmem:[%s5 + $0x74] sm:$0xf]
    %v1630 = vld [vmem:[%s5 + $0x78] sm:$0xf]
    %v1631 = vld [vmem:[%s5 + $0x7c] sm:$0xf]
    %v1632 = vld [vmem:[%s5 + $0x80] sm:$0xf]
    %v1633 = vld [vmem:[%s5 + $0x84] sm:$0xf]
    %v1634 = vld [vmem:[%s5 + $0x88] sm:$0xf]
    %v1635 = vld [vmem:[%s5 + $0x8c] sm:$0xf]
    %v1636 = vld [vmem:[%s5 + $0x90] sm:$0xf]
    %v1637 = vld [vmem:[%s5 + $0x94] sm:$0xf]
    %v1638 = vld [vmem:[%s5 + $0x98] sm:$0xf]
    %v1639 = vld [vmem:[%s5 + $0x9c] sm:$0xf]
    %v1640 = vld [vmem:[%s5 + $0xa0] sm:$0xf]
    %v1641 = vld [vmem:[%s5 + $0xa4] sm:$0xf]
    %v1642 = vld [vmem:[%s5 + $0xa8] sm:$0xf]
    %v1643 = vld [vmem:[%s5 + $0xac] sm:$0xf]
    %v1644 = vld [vmem:[%s5 + $0xb0] sm:$0xf]
    %v1645 = vld [vmem:[%s5 + $0xb4] sm:$0xf]
    %v1646 = vld [vmem:[%s5 + $0xb8] sm:$0xf]
    %v1647 = vld [vmem:[%s5 + $0xbc] sm:$0xf]
    %v1648 = vld [vmem:[%s5 + $0xc0] sm:$0xf]
    %v1649 = vld [vmem:[%s5 + $0xc4] sm:$0xf]
    %v1650 = vld [vmem:[%s5 + $0xc8] sm:$0xf]
    %v1651 = vld [vmem:[%s5 + $0xcc] sm:$0xf]
    %v1652 = vld [vmem:[%s5 + $0xd0] sm:$0xf]
    %v1653 = vld [vmem:[%s5 + $0xd4] sm:$0xf]
    %v1654 = vld [vmem:[%s5 + $0xd8] sm:$0xf]
    %v1655 = vld [vmem:[%s5 + $0xdc] sm:$0xf]
    %v1656 = vld [vmem:[%s5 + $0xe0] sm:$0xf]
    %v1657 = vld [vmem:[%s5 + $0xe4] sm:$0xf]
    %v1658 = vld [vmem:[%s5 + $0xe8] sm:$0xf]
    %v1659 = vld [vmem:[%s5 + $0xec] sm:$0xf]
    %v1660 = vld [vmem:[%s5 + $0xf0] sm:$0xf]
    %v1661 = vld [vmem:[%s5 + $0xf4] sm:$0xf]
    %v1662 = vld [vmem:[%s5 + $0xf8] sm:$0xf]
    %v1663 = vld [vmem:[%s5 + $0xfc] sm:$0xf]
    %v1664 = vld [vmem:[%s6] sm:$0x1]
    %v1666 = vperm.slane %v1664, 0
    %v1732 = vunpack.c.l.b16 %v1600
    %v1733 = vunpack.c.l.b16 %v1601
    %v1734 = vunpack.c.l.b16 %v1602
    %v1735 = vunpack.c.l.b16 %v1603
    %v1736 = vunpack.c.l.b16 %v1604
    %v1737 = vunpack.c.l.b16 %v1605
    %v1738 = vunpack.c.l.b16 %v1606
    %v1739 = vunpack.c.l.b16 %v1607
    %v1740 = vunpack.c.l.b16 %v1608
    %v1741 = vunpack.c.l.b16 %v1609
    %v1742 = vunpack.c.l.b16 %v1610
    %v1743 = vunpack.c.l.b16 %v1611
    %v1744 = vunpack.c.l.b16 %v1612
    %v1745 = vunpack.c.l.b16 %v1613
    %v1746 = vunpack.c.l.b16 %v1614
    %v1747 = vunpack.c.l.b16 %v1615
    %v1748 = vunpack.c.l.b16 %v1616
    %v1749 = vunpack.c.l.b16 %v1617
    %v1750 = vunpack.c.l.b16 %v1618
    %v1751 = vunpack.c.l.b16 %v1619
    %v1752 = vunpack.c.l.b16 %v1620
    %v1753 = vunpack.c.l.b16 %v1621
    %v1754 = vunpack.c.l.b16 %v1622
    %v1755 = vunpack.c.l.b16 %v1623
    %v1756 = vunpack.c.l.b16 %v1624
    %v1757 = vunpack.c.l.b16 %v1625
    %v1758 = vunpack.c.l.b16 %v1626
    %v1759 = vunpack.c.l.b16 %v1627
    %v1760 = vunpack.c.l.b16 %v1628
    %v1761 = vunpack.c.l.b16 %v1629
    %v1762 = vunpack.c.l.b16 %v1630
    %v1763 = vunpack.c.l.b16 %v1631
    %v1764 = vunpack.c.l.b16 %v1632
    %v1765 = vunpack.c.l.b16 %v1633
    %v1766 = vunpack.c.l.b16 %v1634
    %v1767 = vunpack.c.l.b16 %v1635
    %v1768 = vunpack.c.l.b16 %v1636
    %v1769 = vunpack.c.l.b16 %v1637
    %v1770 = vunpack.c.l.b16 %v1638
    %v1771 = vunpack.c.l.b16 %v1639
    %v1772 = vunpack.c.l.b16 %v1640
    %v1773 = vunpack.c.l.b16 %v1641
    %v1774 = vunpack.c.l.b16 %v1642
    %v1775 = vunpack.c.l.b16 %v1643
    %v1776 = vunpack.c.l.b16 %v1644
    %v1777 = vunpack.c.l.b16 %v1645
    %v1778 = vunpack.c.l.b16 %v1646
    %v1779 = vunpack.c.l.b16 %v1647
    %v1780 = vunpack.c.l.b16 %v1648
    %v1781 = vunpack.c.l.b16 %v1649
    %v1782 = vunpack.c.l.b16 %v1650
    %v1783 = vunpack.c.l.b16 %v1651
    %v1784 = vunpack.c.l.b16 %v1652
    %v1785 = vunpack.c.l.b16 %v1653
    %v1786 = vunpack.c.l.b16 %v1654
    %v1787 = vunpack.c.l.b16 %v1655
    %v1788 = vunpack.c.l.b16 %v1656
    %v1789 = vunpack.c.l.b16 %v1657
    %v1790 = vunpack.c.l.b16 %v1658
    %v1791 = vunpack.c.l.b16 %v1659
    %v1792 = vunpack.c.l.b16 %v1660
    %v1793 = vunpack.c.l.b16 %v1661
    %v1794 = vunpack.c.l.b16 %v1662
    %v1795 = vunpack.c.l.b16 %v1663
    %v1796 = vpack.c.b16 %v1733, %v1732
    %v1797 = vpack.c.b16 %v1735, %v1734
    %v1798 = vpack.c.b16 %v1737, %v1736
    %v1799 = vpack.c.b16 %v1739, %v1738
    %v1800 = vpack.c.b16 %v1741, %v1740
    %v1801 = vpack.c.b16 %v1743, %v1742
    %v1802 = vpack.c.b16 %v1745, %v1744
    %v1803 = vpack.c.b16 %v1747, %v1746
    %v1804 = vpack.c.b16 %v1749, %v1748
    %v1805 = vpack.c.b16 %v1751, %v1750
    %v1806 = vpack.c.b16 %v1753, %v1752
    %v1807 = vpack.c.b16 %v1755, %v1754
    %v1808 = vpack.c.b16 %v1757, %v1756
    %v1809 = vpack.c.b16 %v1759, %v1758
    %v1810 = vpack.c.b16 %v1761, %v1760
    %v1811 = vpack.c.b16 %v1763, %v1762
    %v1812 = vpack.c.b16 %v1765, %v1764
    %v1813 = vpack.c.b16 %v1767, %v1766
    %v1814 = vpack.c.b16 %v1769, %v1768
    %v1815 = vpack.c.b16 %v1771, %v1770
    %v1816 = vpack.c.b16 %v1773, %v1772
    %v1817 = vpack.c.b16 %v1775, %v1774
    %v1818 = vpack.c.b16 %v1777, %v1776
    %v1819 = vpack.c.b16 %v1779, %v1778
    %v1820 = vpack.c.b16 %v1781, %v1780
    %v1821 = vpack.c.b16 %v1783, %v1782
    %v1822 = vpack.c.b16 %v1785, %v1784
    %v1823 = vpack.c.b16 %v1787, %v1786
    %v1824 = vpack.c.b16 %v1789, %v1788
    %v1825 = vpack.c.b16 %v1791, %v1790
    %v1826 = vpack.c.b16 %v1793, %v1792
    %v1827 = vpack.c.b16 %v1795, %v1794
    %1860 = vmatpush.bf16.msra.mxu0 %v1803
    %1861 = vmatpush.bf16.msra.mxu0 %v1802
    %1862 = vmatpush.bf16.msra.mxu0 %v1801
    %1863 = vmatpush.bf16.msra.mxu0 %v1800
    %1864 = vmatpush.bf16.msra.mxu0 %v1799
    %1865 = vmatpush.bf16.msra.mxu0 %v1798
    %1866 = vmatpush.bf16.msra.mxu0 %v1797
    %1867 = vmatpush.bf16.msra.mxu0 %v1796
    %1868 = vmatmul.bf16.gmra.mxu0 %v1596
    %v1869 = vpop.f32.mrf.mxu0
    %v1870 = vadd.f32 %v1666, %v1869
    %v1871 = vpop.f32.mrf.mxu0
    %1872 = vdwg.mxu0
    %1873 = vmatpush.bf16.msra.mxu0 %v1811
    %1874 = vmatpush.bf16.msra.mxu0 %v1810
    %1875 = vmatpush.bf16.msra.mxu0 %v1809
    %1876 = vmatpush.bf16.msra.mxu0 %v1808
    %1877 = vmatpush.bf16.msra.mxu0 %v1807
    %1878 = vmatpush.bf16.msra.mxu0 %v1806
    %1879 = vmatpush.bf16.msra.mxu0 %v1805
    %1880 = vmatpush.bf16.msra.mxu0 %v1804
    %1881 = vmatmul.bf16.gmra.mxu0 %v1597
    %v1882 = vpop.f32.mrf.mxu0
    %v1883 = vadd.f32 %v1870, %v1882
    %v1884 = vpop.f32.mrf.mxu0
    %1885 = vdwg.mxu0
    %1886 = vmatpush.bf16.msra.mxu0 %v1819
    %1887 = vmatpush.bf16.msra.mxu0 %v1818
    %1888 = vmatpush.bf16.msra.mxu0 %v1817
    %1889 = vmatpush.bf16.msra.mxu0 %v1816
    %1890 = vmatpush.bf16.msra.mxu0 %v1815
    %1891 = vmatpush.bf16.msra.mxu0 %v1814
    %1892 = vmatpush.bf16.msra.mxu0 %v1813
    %1893 = vmatpush.bf16.msra.mxu0 %v1812
    %1894 = vmatmul.bf16.gmra.mxu0 %v1598
    %v1895 = vpop.f32.mrf.mxu0
    %v1896 = vadd.f32 %v1883, %v1895
    %v1897 = vpop.f32.mrf.mxu0
    %1898 = vdwg.mxu0
    %1899 = vmatpush.bf16.msra.mxu0 %v1827
    %1900 = vmatpush.bf16.msra.mxu0 %v1826
    %1901 = vmatpush.bf16.msra.mxu0 %v1825
    %1902 = vmatpush.bf16.msra.mxu0 %v1824
    %1903 = vmatpush.bf16.msra.mxu0 %v1823
    %1904 = vmatpush.bf16.msra.mxu0 %v1822
    %1905 = vmatpush.bf16.msra.mxu0 %v1821
    %1906 = vmatpush.bf16.msra.mxu0 %v1820
    %1907 = vmatmul.bf16.gmra.mxu0 %v1599
    %v1908 = vpop.f32.mrf.mxu0
    %v1909 = vadd.f32 %v1896, %v1908
    %v1910 = vpop.f32.mrf.mxu0
    %1911 = vdwg.mxu0
    %v1912 = vmax.f32 %v1909, 0.0
    %v1913 = vpack.c.bf16 %v1912, %v1912
    %v1914 = vld [vmem:[%s7] sm:$0xf]
    %v1915 = vld [vmem:[%s7 + $0x4] sm:$0xf]
    %v1916 = vld [vmem:[%s7 + $0x8] sm:$0xf]
    %v1917 = vld [vmem:[%s7 + $0xc] sm:$0xf]
    %v1918 = vld [vmem:[%s8] sm:$0x1]
    %v1920 = vperm.slane %v1918, 0
    %v1926 = vunpack.c.l.b16 %v1914
    %v1927 = vunpack.c.l.b16 %v1915
    %v1928 = vunpack.c.l.b16 %v1916
    %v1929 = vunpack.c.l.b16 %v1917
    %v1930 = vpack.c.b16 %v1927, %v1926
    %v1931 = vpack.c.b16 %v1929, %v1928
    %v1935 = vsel %vm526, %v1913, 0
    %1937 = vmatpush.bf16.msra.mxu0 0
    %1938 = vmatpush.bf16.msra.mxu0 0
    %1939 = vmatpush.bf16.msra.mxu0 0
    %1940 = vmatpush.bf16.msra.mxu0 0
    %1941 = vmatpush.bf16.msra.mxu0 0
    %1942 = vmatpush.bf16.msra.mxu0 0
    %1943 = vmatpush.bf16.msra.mxu0 %v1931
    %1944 = vmatpush.bf16.msra.mxu0 %v1930
    %1945 = vmatmul.bf16.gmra.mxu0 %v1935
    %v1946 = vpop.f32.mrf.mxu0
    %v1947 = vadd.f32 %v1920, %v1946
    %v1948 = vpop.f32.mrf.mxu0
    %1949 = vdwg.mxu0
    %1950 = vst [vmem:[#allocation4] sm:$0x3] %v1947
    // Predicated region
    $region38: #{sample_convnet_forward.1} parent=1 // pred_check
      _
    $region39: #{sample_convnet_forward.1} parent=1 // pred_check_branch
      %1952 = sbr.rel (0) target = $region41
    $region40: #{sample_convnet_forward.1} parent=1 // pred_region
      %1954 = vsyncadd [#allocation5], 0
      %s1956 = sshll.u32 [#allocation4], 4
      %s1957 = int_to_ptr.vmem [resolvable:$true] %s1956
      %s1958 = sshll.u32 %s9, 4
      %s1959 = int_to_ptr.hbm [resolvable:$true] %s1958
      %1961 = dma.vmem_to_hbm [thread:$0]  %s1957, 32, %s1959, [#allocation5]
    $region41: #{sample_convnet_forward.1} parent=1 // pred_fallthru
      _
    // Predicated region
    $region42: #{sample_convnet_forward.1} parent=1 // pred_check
      _
    $region43: #{sample_convnet_forward.1} parent=1 // pred_check_branch
      %1963 = sbr.rel (0) target = $region45
    $region44: #{sample_convnet_forward.1} parent=1 // pred_region
      %1965 = dma.done [#allocation5], 32
    $region45: #{sample_convnet_forward.1} parent=1 // pred_fallthru
      _
    %1966 = vsyncpa [#allocation5], 1

</llo_original>
